<compile_context>
chip_gen: v7x
topology: tpu7x:2x2x1
jax: 0.10.0
libtpu: 0.0.40
codegen_flags: <defaults>
</compile_context>

<pallas_src>
import functools

import jax
import jax.numpy as jnp
import numpy as np
from jax import lax
from jax.experimental import pallas as pl
from jax.experimental.pallas import tpu as pltpu


def _pick_bt(batch, channels, max_rows=32):
    """Batch elements folded per grid step.

    Prefers sublane-aligned blocks (bt*C % 8 == 0), keeps >=2 grid steps when
    B >= 2 (so both v7x TensorCores get work), and caps rows to bound vreg
    pressure.
    """
    cands = [bt for bt in range(1, batch + 1)
             if batch % bt == 0
             and bt * channels <= max_rows
             and (batch // bt >= 2 or batch == 1)]
    if not cands:
        return 1
    aligned = [bt for bt in cands if (bt * channels) % 8 == 0]
    return max(aligned) if aligned else max(cands)


def _sdc_kernel(x_ref, ws_ref, wbd_ref, b_ref, o_ref, *, H, W):
    # x_ref  : (1, R, HW)  lane-dense block; row r = (batch b = r//C, chan c = r%C)
    # ws_ref : (9,)        shared 3x3 filter taps, row-major (SMEM scalars)
    # wbd_ref: (9, R, R)   per-tap block-diagonal dense-conv weights
    # b_ref  : (R, 1)      dense-conv bias per row
    # o_ref  : (1, R, HW)
    HW = H * W

    xv = x_ref[0]                                     # (R, HW) f32, lane-dense

    # ---- per-tap boundary masks, built once per step from one 2-D iota ------
    lane = lax.broadcasted_iota(jnp.int32, (1, HW), 1)
    col = lane % W
    ok_up = (lane >= W).astype(jnp.float32)           # reading row y-1 is valid
    ok_dn = (lane < HW - W).astype(jnp.float32)       # reading row y+1 is valid
    ok_lf = (col != 0).astype(jnp.float32)            # reading col x-1 is valid
    ok_rt = (col != W - 1).astype(jnp.float32)        # reading col x+1 is valid

    def _mask(dy, dx):
        m = None
        if dy == -1:
            m = ok_up
        elif dy == 1:
            m = ok_dn
        if dx == -1:
            m = ok_lf if m is None else m * ok_lf
        elif dx == 1:
            m = ok_rt if m is None else m * ok_rt
        return m                                      # None -> no masking needed

    masks = {(dy, dx): _mask(dy, dx) for dy in (-1, 0, 1) for dx in (-1, 0, 1)}

    def shift(v, dy, dx):
        """result[.., y*W+x] = v[.., (y+dy)*W + (x+dx)], zero outside the image.

        A single lane-axis roll (XLU slot) + a (1, HW) boundary mask replaces
        the old padded-plane slices; wrap-around artifacts land exactly on the
        masked positions.
        """
        off = dy * W + dx
        r = v if off == 0 else pltpu.roll(v, shift=(-off) % HW, axis=1)
        m = masks[(dy, dx)]
        return r if m is None else r * m

    # ---- SharedConv (same 3x3 filter on every plane) + first residual -------
    s = xv + ws_ref[4] * xv                           # residual + center tap
    for kh in range(3):
        for kw in range(3):
            if kh == 1 and kw == 1:
                continue
            s = s + ws_ref[kh * 3 + kw] * shift(xv, kh - 1, kw - 1)

    # ---- dense 3x3 conv: 9 per-tap block-diag MXU matmuls + bias + residual -
    out = xv + b_ref[...]                             # second residual + bias
    for kh in range(3):
        for kw in range(3):
            t = kh * 3 + kw
            sh = shift(s, kh - 1, kw - 1)             # (R, HW)
            out = out + jnp.dot(wbd_ref[t], sh,
                                preferred_element_type=jnp.float32)

    o_ref[0] = out.astype(o_ref.dtype)


def sdc_forward(x, w_shared, w_dil, b_dil, *, bt=None):
    """x: (B, C, H, W) f32.  w_shared: (3,3).  w_dil: (C,C,3,3) OIHW.  b_dil: (C,)."""
    B, C, H, W = x.shape
    HW = H * W
    if bt is None:
        bt = _pick_bt(B, C)
    if B % bt != 0:
        raise ValueError(f"bt={bt} must divide B={B}")
    R = bt * C                                        # rows per block
    G = B // bt                                       # grid steps

    # Layout-preserving (free) reshape: rows ordered (batch, channel).
    x3 = x.reshape(G, R, HW)

    ws = w_shared.reshape(9)                          # SMEM scalars

    # (C_out, C_in, kh, kw) -> per-tap (C_out, C_in), then block-diagonal over
    # the bt batch elements folded into each grid step: kron(I_bt, w_tap).
    w_taps = jnp.transpose(w_dil, (2, 3, 0, 1)).reshape(9, C, C)
    eye = jnp.eye(bt, dtype=w_dil.dtype)
    wbd = jnp.einsum('bd,tij->tbidj', eye, w_taps).reshape(9, R, R)

    b2d = jnp.tile(b_dil.reshape(1, C), (bt, 1)).reshape(R, 1)

    kernel = functools.partial(_sdc_kernel, H=H, W=W)

    # TODO(synk): if this op sits on a hot path with tiny B (~16 KiB of HBM
    # traffic), fuse it into the surrounding kernel instead of a standalone
    # pallas_call; as a standalone call it is launch-overhead bound on v5e/v6e.
    out3 = pl.pallas_call(
        kernel,
        out_shape=jax.ShapeDtypeStruct((G, R, HW), x.dtype),
        grid_spec=pltpu.PrefetchScalarGridSpec(
            num_scalar_prefetch=0,
            grid=(G,),
            in_specs=[
                pl.BlockSpec((1, R, HW), lambda g: (g, 0, 0)),            # x
                pl.BlockSpec(memory_space=pltpu.MemorySpace.SMEM),        # w_shared
                pl.BlockSpec((9, R, R), lambda g: (0, 0, 0)),             # wbd
                pl.BlockSpec((R, 1), lambda g: (0, 0)),                   # bias
            ],
            out_specs=pl.BlockSpec((1, R, HW), lambda g: (g, 0, 0)),
        ),
        compiler_params=pltpu.CompilerParams(
            dimension_semantics=("parallel",)),
    )(x3, ws, wbd, b2d)

    return out3.reshape(B, C, H, W)


def sdc_reference(x, w_shared, w_dil, b_dil):
    """Pure-JAX reference matching the PyTorch SDC forward."""
    C = x.shape[1]
    dw_w = jnp.broadcast_to(w_shared[None, None, :, :], (C, 1, 3, 3))
    shared = lax.conv_general_dilated(
        x, dw_w, window_strides=(1, 1), padding=((1, 1), (1, 1)),
        dimension_numbers=("NCHW", "OIHW", "NCHW"), feature_group_count=C)
    s = shared + x
    dil = lax.conv_general_dilated(
        s, w_dil, window_strides=(1, 1), padding=((1, 1), (1, 1)),
        dimension_numbers=("NCHW", "OIHW", "NCHW"))
    dil = dil + b_dil[None, :, None, None]
    return dil + x


if __name__ == "__main__":
    B, C, H, W = 2, 4, 16, 16
    key = jax.random.PRNGKey(0)
    kx, kws, kwd, kb = jax.random.split(key, 4)

    x = jax.random.normal(kx, (B, C, H, W), jnp.float32)
    # Deterministic synthetic parameters (shapes from the module's __init__).
    w_shared = jax.random.normal(kws, (3, 3), jnp.float32) * 0.1      # Conv2d(1,1,3), no bias
    w_dil = jax.random.normal(kwd, (C, C, 3, 3), jnp.float32) * 0.1   # Conv2d(C,C,3), bias=True
    b_dil = jax.random.normal(kb, (C,), jnp.float32) * 0.1

    out = jax.block_until_ready(sdc_forward(x, w_shared, w_dil, b_dil))
    ref = jax.block_until_ready(sdc_reference(x, w_shared, w_dil, b_dil))
    np.testing.assert_allclose(np.asarray(out), np.asarray(ref), rtol=1e-4, atol=1e-4)

    # Also exercise the batch-folding path (Bt > 1, sublane-dense blocks).
    x8 = jax.random.normal(jax.random.PRNGKey(1), (8, C, H, W), jnp.float32)
    out8 = jax.block_until_ready(sdc_forward(x8, w_shared, w_dil, b_dil))
    ref8 = jax.block_until_ready(sdc_reference(x8, w_shared, w_dil, b_dil))
    np.testing.assert_allclose(np.asarray(out8), np.asarray(ref8), rtol=1e-4, atol=1e-4)

    print("KERNEL_OK")
</pallas_src>

<mosaic_0001>
module attributes {stable_mosaic.version = 11 : i64} {
  func.func @_sdc_kernel(%arg0: i32, %arg1: memref<1x4x256xf32, #tpu.memory_space<vmem>>, %arg2: memref<9xf32, #tpu.memory_space<smem>>, %arg3: memref<9x4x4xf32, #tpu.memory_space<vmem>>, %arg4: memref<4x1xf32, #tpu.memory_space<vmem>>, %arg5: memref<1x4x256xf32, #tpu.memory_space<vmem>>) attributes {dimension_semantics = [#tpu.dimension_semantics<parallel>], iteration_bounds = array<i64: 2>, scalar_prefetch = 0 : i64, scratch_operands = 0 : i64, tpu.core_type = #tpu.core_type<tc>, window_params = [{transform_indices = @transform_0, window_bounds = array<i64: 1, 4, 256>}, {transform_indices = @transform_1, window_bounds = array<i64: 9>}, {pipeline_mode = #tpu.pipeline_mode<synchronous>, transform_indices = @transform_2, window_bounds = array<i64: 9, 4, 4>}, {pipeline_mode = #tpu.pipeline_mode<synchronous>, transform_indices = @transform_3, window_bounds = array<i64: 4, 1>}, {transform_indices = @transform_4, window_bounds = array<i64: 1, 4, 256>}]} {
    %c0 = arith.constant 0 : index
    %c0_0 = arith.constant 0 : index
    %c0_1 = arith.constant 0 : index
    %0 = vector.load %arg1[%c0, %c0_0, %c0_1] : memref<1x4x256xf32, #tpu.memory_space<vmem>>, vector<1x4x256xf32>
    %1 = vector.shape_cast %0 : vector<1x4x256xf32> to vector<4x256xf32>
    %2 = tpu.iota {dimensions = array<i32: 1>} : vector<1x256xi32>
    %c16_i32 = arith.constant 16 : i32
    %c0_i32 = arith.constant 0 : i32
    %3 = arith.cmpi eq, %c16_i32, %c0_i32 : i32
    %c1_i32 = arith.constant 1 : i32
    %4 = arith.select %3, %c1_i32, %c16_i32 : i32
    %5 = vector.broadcast %4 : i32 to vector<1x256xi32>
    %6 = arith.remsi %2, %5 : vector<1x256xi32>
    %c0_i32_2 = arith.constant 0 : i32
    %7 = vector.broadcast %c0_i32_2 : i32 to vector<1x256xi32>
    %8 = arith.cmpi ne, %6, %7 : vector<1x256xi32>
    %c0_i32_3 = arith.constant 0 : i32
    %9 = vector.broadcast %c0_i32_3 : i32 to vector<1x256xi32>
    %10 = arith.cmpi slt, %6, %9 : vector<1x256xi32>
    %c0_i32_4 = arith.constant 0 : i32
    %11 = arith.cmpi slt, %4, %c0_i32_4 : i32
    %12 = vector.broadcast %11 : i1 to vector<1x256xi1>
    %13 = vector.broadcast %12 : vector<1x256xi1> to vector<1x256xi1>
    %14 = arith.xori %10, %13 : vector<1x256xi1>
    %15 = arith.andi %14, %8 : vector<1x256xi1>
    %16 = vector.broadcast %4 : i32 to vector<1x256xi32>
    %17 = arith.addi %6, %16 : vector<1x256xi32>
    %18 = arith.select %15, %17, %6 : vector<1x256xi1>, vector<1x256xi32>
    %c16_i32_5 = arith.constant 16 : i32
    %19 = vector.broadcast %c16_i32_5 : i32 to vector<1x256xi32>
    %20 = arith.cmpi sge, %2, %19 : vector<1x256xi32>
    %21 = arith.extui %20 : vector<1x256xi1> to vector<1x256xi32>
    %22 = arith.sitofp %21 : vector<1x256xi32> to vector<1x256xf32>
    %c240_i32 = arith.constant 240 : i32
    %23 = vector.broadcast %c240_i32 : i32 to vector<1x256xi32>
    %24 = arith.cmpi slt, %2, %23 : vector<1x256xi32>
    %25 = arith.extui %24 : vector<1x256xi1> to vector<1x256xi32>
    %26 = arith.sitofp %25 : vector<1x256xi32> to vector<1x256xf32>
    %c0_i32_6 = arith.constant 0 : i32
    %27 = vector.broadcast %c0_i32_6 : i32 to vector<1x256xi32>
    %28 = arith.cmpi ne, %18, %27 : vector<1x256xi32>
    %29 = arith.extui %28 : vector<1x256xi1> to vector<1x256xi32>
    %30 = arith.sitofp %29 : vector<1x256xi32> to vector<1x256xf32>
    %c15_i32 = arith.constant 15 : i32
    %31 = vector.broadcast %c15_i32 : i32 to vector<1x256xi32>
    %32 = arith.cmpi ne, %18, %31 : vector<1x256xi32>
    %33 = arith.extui %32 : vector<1x256xi1> to vector<1x256xi32>
    %34 = arith.sitofp %33 : vector<1x256xi32> to vector<1x256xf32>
    %35 = arith.mulf %22, %30 : vector<1x256xf32>
    %36 = arith.mulf %22, %34 : vector<1x256xf32>
    %37 = arith.mulf %26, %30 : vector<1x256xf32>
    %38 = arith.mulf %26, %34 : vector<1x256xf32>
    %c4 = arith.constant 4 : index
    %39 = memref.load %arg2[%c4] : memref<9xf32, #tpu.memory_space<smem>>
    %40 = vector.broadcast %39 : f32 to vector<4x256xf32>
    %41 = arith.mulf %40, %1 : vector<4x256xf32>
    %42 = arith.addf %1, %41 : vector<4x256xf32>
    %c0_7 = arith.constant 0 : index
    %43 = memref.load %arg2[%c0_7] : memref<9xf32, #tpu.memory_space<smem>>
    %c17_i32 = arith.constant 17 : i32
    %44 = tpu.dynamic_rotate %1 by %c17_i32 dim 1 : vector<4x256xf32>, i32 -> vector<4x256xf32>
    %45 = vector.broadcast %35 : vector<1x256xf32> to vector<4x256xf32>
    %46 = arith.mulf %44, %45 : vector<4x256xf32>
    %47 = vector.broadcast %43 : f32 to vector<4x256xf32>
    %48 = arith.mulf %47, %46 : vector<4x256xf32>
    %49 = arith.addf %42, %48 : vector<4x256xf32>
    %c1 = arith.constant 1 : index
    %50 = memref.load %arg2[%c1] : memref<9xf32, #tpu.memory_space<smem>>
    %c16_i32_8 = arith.constant 16 : i32
    %51 = tpu.dynamic_rotate %1 by %c16_i32_8 dim 1 : vector<4x256xf32>, i32 -> vector<4x256xf32>
    %52 = vector.broadcast %22 : vector<1x256xf32> to vector<4x256xf32>
    %53 = arith.mulf %51, %52 : vector<4x256xf32>
    %54 = vector.broadcast %50 : f32 to vector<4x256xf32>
    %55 = arith.mulf %54, %53 : vector<4x256xf32>
    %56 = arith.addf %49, %55 : vector<4x256xf32>
    %c2 = arith.constant 2 : index
    %57 = memref.load %arg2[%c2] : memref<9xf32, #tpu.memory_space<smem>>
    %c15_i32_9 = arith.constant 15 : i32
    %58 = tpu.dynamic_rotate %1 by %c15_i32_9 dim 1 : vector<4x256xf32>, i32 -> vector<4x256xf32>
    %59 = vector.broadcast %36 : vector<1x256xf32> to vector<4x256xf32>
    %60 = arith.mulf %58, %59 : vector<4x256xf32>
    %61 = vector.broadcast %57 : f32 to vector<4x256xf32>
    %62 = arith.mulf %61, %60 : vector<4x256xf32>
    %63 = arith.addf %56, %62 : vector<4x256xf32>
    %c3 = arith.constant 3 : index
    %64 = memref.load %arg2[%c3] : memref<9xf32, #tpu.memory_space<smem>>
    %c1_i32_10 = arith.constant 1 : i32
    %65 = tpu.dynamic_rotate %1 by %c1_i32_10 dim 1 : vector<4x256xf32>, i32 -> vector<4x256xf32>
    %66 = vector.broadcast %30 : vector<1x256xf32> to vector<4x256xf32>
    %67 = arith.mulf %65, %66 : vector<4x256xf32>
    %68 = vector.broadcast %64 : f32 to vector<4x256xf32>
    %69 = arith.mulf %68, %67 : vector<4x256xf32>
    %70 = arith.addf %63, %69 : vector<4x256xf32>
    %c5 = arith.constant 5 : index
    %71 = memref.load %arg2[%c5] : memref<9xf32, #tpu.memory_space<smem>>
    %c255_i32 = arith.constant 255 : i32
    %72 = tpu.dynamic_rotate %1 by %c255_i32 dim 1 : vector<4x256xf32>, i32 -> vector<4x256xf32>
    %73 = vector.broadcast %34 : vector<1x256xf32> to vector<4x256xf32>
    %74 = arith.mulf %72, %73 : vector<4x256xf32>
    %75 = vector.broadcast %71 : f32 to vector<4x256xf32>
    %76 = arith.mulf %75, %74 : vector<4x256xf32>
    %77 = arith.addf %70, %76 : vector<4x256xf32>
    %c6 = arith.constant 6 : index
    %78 = memref.load %arg2[%c6] : memref<9xf32, #tpu.memory_space<smem>>
    %c241_i32 = arith.constant 241 : i32
    %79 = tpu.dynamic_rotate %1 by %c241_i32 dim 1 : vector<4x256xf32>, i32 -> vector<4x256xf32>
    %80 = vector.broadcast %37 : vector<1x256xf32> to vector<4x256xf32>
    %81 = arith.mulf %79, %80 : vector<4x256xf32>
    %82 = vector.broadcast %78 : f32 to vector<4x256xf32>
    %83 = arith.mulf %82, %81 : vector<4x256xf32>
    %84 = arith.addf %77, %83 : vector<4x256xf32>
    %c7 = arith.constant 7 : index
    %85 = memref.load %arg2[%c7] : memref<9xf32, #tpu.memory_space<smem>>
    %c240_i32_11 = arith.constant 240 : i32
    %86 = tpu.dynamic_rotate %1 by %c240_i32_11 dim 1 : vector<4x256xf32>, i32 -> vector<4x256xf32>
    %87 = vector.broadcast %26 : vector<1x256xf32> to vector<4x256xf32>
    %88 = arith.mulf %86, %87 : vector<4x256xf32>
    %89 = vector.broadcast %85 : f32 to vector<4x256xf32>
    %90 = arith.mulf %89, %88 : vector<4x256xf32>
    %91 = arith.addf %84, %90 : vector<4x256xf32>
    %c8 = arith.constant 8 : index
    %92 = memref.load %arg2[%c8] : memref<9xf32, #tpu.memory_space<smem>>
    %c239_i32 = arith.constant 239 : i32
    %93 = tpu.dynamic_rotate %1 by %c239_i32 dim 1 : vector<4x256xf32>, i32 -> vector<4x256xf32>
    %94 = vector.broadcast %38 : vector<1x256xf32> to vector<4x256xf32>
    %95 = arith.mulf %93, %94 : vector<4x256xf32>
    %96 = vector.broadcast %92 : f32 to vector<4x256xf32>
    %97 = arith.mulf %96, %95 : vector<4x256xf32>
    %98 = arith.addf %91, %97 : vector<4x256xf32>
    %c0_12 = arith.constant 0 : index
    %c0_13 = arith.constant 0 : index
    %99 = vector.load %arg4[%c0_12, %c0_13] : memref<4x1xf32, #tpu.memory_space<vmem>>, vector<4x1xf32>
    %100 = vector.broadcast %99 : vector<4x1xf32> to vector<4x256xf32>
    %101 = arith.addf %1, %100 : vector<4x256xf32>
    %c17_i32_14 = arith.constant 17 : i32
    %102 = tpu.dynamic_rotate %98 by %c17_i32_14 dim 1 : vector<4x256xf32>, i32 -> vector<4x256xf32>
    %103 = vector.broadcast %35 : vector<1x256xf32> to vector<4x256xf32>
    %104 = arith.mulf %102, %103 : vector<4x256xf32>
    %c0_15 = arith.constant 0 : index
    %c0_16 = arith.constant 0 : index
    %c0_17 = arith.constant 0 : index
    %105 = vector.load %arg3[%c0_15, %c0_16, %c0_17] : memref<9x4x4xf32, #tpu.memory_space<vmem>>, vector<1x4x4xf32>
    %106 = vector.shape_cast %105 : vector<1x4x4xf32> to vector<4x4xf32>
    %cst = arith.constant dense<0.000000e+00> : vector<4x256xf32>
    %107 = tpu.matmul %106, %104, %cst {dimension_numbers = #tpu.dot_dimension_numbers<[1], [0], [0], [1], [0, 0, 1, 1], [], []>} : vector<4x4xf32>, vector<4x256xf32>, vector<4x256xf32> -> vector<4x256xf32>
    %108 = arith.addf %101, %107 : vector<4x256xf32>
    %c16_i32_18 = arith.constant 16 : i32
    %109 = tpu.dynamic_rotate %98 by %c16_i32_18 dim 1 : vector<4x256xf32>, i32 -> vector<4x256xf32>
    %110 = vector.broadcast %22 : vector<1x256xf32> to vector<4x256xf32>
    %111 = arith.mulf %109, %110 : vector<4x256xf32>
    %c1_19 = arith.constant 1 : index
    %c0_20 = arith.constant 0 : index
    %c0_21 = arith.constant 0 : index
    %112 = vector.load %arg3[%c1_19, %c0_20, %c0_21] : memref<9x4x4xf32, #tpu.memory_space<vmem>>, vector<1x4x4xf32>
    %113 = vector.shape_cast %112 : vector<1x4x4xf32> to vector<4x4xf32>
    %cst_22 = arith.constant dense<0.000000e+00> : vector<4x256xf32>
    %114 = tpu.matmul %113, %111, %cst_22 {dimension_numbers = #tpu.dot_dimension_numbers<[1], [0], [0], [1], [0, 0, 1, 1], [], []>} : vector<4x4xf32>, vector<4x256xf32>, vector<4x256xf32> -> vector<4x256xf32>
    %115 = arith.addf %108, %114 : vector<4x256xf32>
    %c15_i32_23 = arith.constant 15 : i32
    %116 = tpu.dynamic_rotate %98 by %c15_i32_23 dim 1 : vector<4x256xf32>, i32 -> vector<4x256xf32>
    %117 = vector.broadcast %36 : vector<1x256xf32> to vector<4x256xf32>
    %118 = arith.mulf %116, %117 : vector<4x256xf32>
    %c2_24 = arith.constant 2 : index
    %c0_25 = arith.constant 0 : index
    %c0_26 = arith.constant 0 : index
    %119 = vector.load %arg3[%c2_24, %c0_25, %c0_26] : memref<9x4x4xf32, #tpu.memory_space<vmem>>, vector<1x4x4xf32>
    %120 = vector.shape_cast %119 : vector<1x4x4xf32> to vector<4x4xf32>
    %cst_27 = arith.constant dense<0.000000e+00> : vector<4x256xf32>
    %121 = tpu.matmul %120, %118, %cst_27 {dimension_numbers = #tpu.dot_dimension_numbers<[1], [0], [0], [1], [0, 0, 1, 1], [], []>} : vector<4x4xf32>, vector<4x256xf32>, vector<4x256xf32> -> vector<4x256xf32>
    %122 = arith.addf %115, %121 : vector<4x256xf32>
    %c1_i32_28 = arith.constant 1 : i32
    %123 = tpu.dynamic_rotate %98 by %c1_i32_28 dim 1 : vector<4x256xf32>, i32 -> vector<4x256xf32>
    %124 = vector.broadcast %30 : vector<1x256xf32> to vector<4x256xf32>
    %125 = arith.mulf %123, %124 : vector<4x256xf32>
    %c3_29 = arith.constant 3 : index
    %c0_30 = arith.constant 0 : index
    %c0_31 = arith.constant 0 : index
    %126 = vector.load %arg3[%c3_29, %c0_30, %c0_31] : memref<9x4x4xf32, #tpu.memory_space<vmem>>, vector<1x4x4xf32>
    %127 = vector.shape_cast %126 : vector<1x4x4xf32> to vector<4x4xf32>
    %cst_32 = arith.constant dense<0.000000e+00> : vector<4x256xf32>
    %128 = tpu.matmul %127, %125, %cst_32 {dimension_numbers = #tpu.dot_dimension_numbers<[1], [0], [0], [1], [0, 0, 1, 1], [], []>} : vector<4x4xf32>, vector<4x256xf32>, vector<4x256xf32> -> vector<4x256xf32>
    %129 = arith.addf %122, %128 : vector<4x256xf32>
    %c4_33 = arith.constant 4 : index
    %c0_34 = arith.constant 0 : index
    %c0_35 = arith.constant 0 : index
    %130 = vector.load %arg3[%c4_33, %c0_34, %c0_35] : memref<9x4x4xf32, #tpu.memory_space<vmem>>, vector<1x4x4xf32>
    %131 = vector.shape_cast %130 : vector<1x4x4xf32> to vector<4x4xf32>
    %cst_36 = arith.constant dense<0.000000e+00> : vector<4x256xf32>
    %132 = tpu.matmul %131, %98, %cst_36 {dimension_numbers = #tpu.dot_dimension_numbers<[1], [0], [0], [1], [0, 0, 1, 1], [], []>} : vector<4x4xf32>, vector<4x256xf32>, vector<4x256xf32> -> vector<4x256xf32>
    %133 = arith.addf %129, %132 : vector<4x256xf32>
    %c255_i32_37 = arith.constant 255 : i32
    %134 = tpu.dynamic_rotate %98 by %c255_i32_37 dim 1 : vector<4x256xf32>, i32 -> vector<4x256xf32>
    %135 = vector.broadcast %34 : vector<1x256xf32> to vector<4x256xf32>
    %136 = arith.mulf %134, %135 : vector<4x256xf32>
    %c5_38 = arith.constant 5 : index
    %c0_39 = arith.constant 0 : index
    %c0_40 = arith.constant 0 : index
    %137 = vector.load %arg3[%c5_38, %c0_39, %c0_40] : memref<9x4x4xf32, #tpu.memory_space<vmem>>, vector<1x4x4xf32>
    %138 = vector.shape_cast %137 : vector<1x4x4xf32> to vector<4x4xf32>
    %cst_41 = arith.constant dense<0.000000e+00> : vector<4x256xf32>
    %139 = tpu.matmul %138, %136, %cst_41 {dimension_numbers = #tpu.dot_dimension_numbers<[1], [0], [0], [1], [0, 0, 1, 1], [], []>} : vector<4x4xf32>, vector<4x256xf32>, vector<4x256xf32> -> vector<4x256xf32>
    %140 = arith.addf %133, %139 : vector<4x256xf32>
    %c241_i32_42 = arith.constant 241 : i32
    %141 = tpu.dynamic_rotate %98 by %c241_i32_42 dim 1 : vector<4x256xf32>, i32 -> vector<4x256xf32>
    %142 = vector.broadcast %37 : vector<1x256xf32> to vector<4x256xf32>
    %143 = arith.mulf %141, %142 : vector<4x256xf32>
    %c6_43 = arith.constant 6 : index
    %c0_44 = arith.constant 0 : index
    %c0_45 = arith.constant 0 : index
    %144 = vector.load %arg3[%c6_43, %c0_44, %c0_45] : memref<9x4x4xf32, #tpu.memory_space<vmem>>, vector<1x4x4xf32>
    %145 = vector.shape_cast %144 : vector<1x4x4xf32> to vector<4x4xf32>
    %cst_46 = arith.constant dense<0.000000e+00> : vector<4x256xf32>
    %146 = tpu.matmul %145, %143, %cst_46 {dimension_numbers = #tpu.dot_dimension_numbers<[1], [0], [0], [1], [0, 0, 1, 1], [], []>} : vector<4x4xf32>, vector<4x256xf32>, vector<4x256xf32> -> vector<4x256xf32>
    %147 = arith.addf %140, %146 : vector<4x256xf32>
    %c240_i32_47 = arith.constant 240 : i32
    %148 = tpu.dynamic_rotate %98 by %c240_i32_47 dim 1 : vector<4x256xf32>, i32 -> vector<4x256xf32>
    %149 = vector.broadcast %26 : vector<1x256xf32> to vector<4x256xf32>
    %150 = arith.mulf %148, %149 : vector<4x256xf32>
    %c7_48 = arith.constant 7 : index
    %c0_49 = arith.constant 0 : index
    %c0_50 = arith.constant 0 : index
    %151 = vector.load %arg3[%c7_48, %c0_49, %c0_50] : memref<9x4x4xf32, #tpu.memory_space<vmem>>, vector<1x4x4xf32>
    %152 = vector.shape_cast %151 : vector<1x4x4xf32> to vector<4x4xf32>
    %cst_51 = arith.constant dense<0.000000e+00> : vector<4x256xf32>
    %153 = tpu.matmul %152, %150, %cst_51 {dimension_numbers = #tpu.dot_dimension_numbers<[1], [0], [0], [1], [0, 0, 1, 1], [], []>} : vector<4x4xf32>, vector<4x256xf32>, vector<4x256xf32> -> vector<4x256xf32>
    %154 = arith.addf %147, %153 : vector<4x256xf32>
    %c239_i32_52 = arith.constant 239 : i32
    %155 = tpu.dynamic_rotate %98 by %c239_i32_52 dim 1 : vector<4x256xf32>, i32 -> vector<4x256xf32>
    %156 = vector.broadcast %38 : vector<1x256xf32> to vector<4x256xf32>
    %157 = arith.mulf %155, %156 : vector<4x256xf32>
    %c8_53 = arith.constant 8 : index
    %c0_54 = arith.constant 0 : index
    %c0_55 = arith.constant 0 : index
    %158 = vector.load %arg3[%c8_53, %c0_54, %c0_55] : memref<9x4x4xf32, #tpu.memory_space<vmem>>, vector<1x4x4xf32>
    %159 = vector.shape_cast %158 : vector<1x4x4xf32> to vector<4x4xf32>
    %cst_56 = arith.constant dense<0.000000e+00> : vector<4x256xf32>
    %160 = tpu.matmul %159, %157, %cst_56 {dimension_numbers = #tpu.dot_dimension_numbers<[1], [0], [0], [1], [0, 0, 1, 1], [], []>} : vector<4x4xf32>, vector<4x256xf32>, vector<4x256xf32> -> vector<4x256xf32>
    %161 = arith.addf %154, %160 : vector<4x256xf32>
    %c0_57 = arith.constant 0 : index
    %c0_58 = arith.constant 0 : index
    %c0_59 = arith.constant 0 : index
    %162 = vector.load %arg5[%c0_57, %c0_58, %c0_59] : memref<1x4x256xf32, #tpu.memory_space<vmem>>, vector<1x4x256xf32>
    %163 = vector.shape_cast %162 : vector<1x4x256xf32> to vector<4x256xf32>
    %164 = vector.shape_cast %161 : vector<4x256xf32> to vector<1x4x256xf32>
    tpu.vector_store %arg5[%c0_57, %c0_58, %c0_59], %164 {strides = array<i32>} : memref<1x4x256xf32, #tpu.memory_space<vmem>>, vector<1x4x256xf32>,
    return
  }
  func.func @transform_0(%arg0: i32) -> (i32, i32, i32) {
    %c0_i32 = arith.constant 0 : i32
    %c0_i32_0 = arith.constant 0 : i32
    %c0_i32_1 = arith.constant 0 : i32
    return %arg0, %c0_i32, %c0_i32_0 : i32, i32, i32
  }
  func.func @transform_1(%arg0: i32) -> i32 {
    %c0_i32 = arith.constant 0 : i32
    %c0_i32_0 = arith.constant 0 : i32
    return %c0_i32 : i32
  }
  func.func @transform_2(%arg0: i32) -> (i32, i32, i32) {
    %c0_i32 = arith.constant 0 : i32
    %c0_i32_0 = arith.constant 0 : i32
    %c0_i32_1 = arith.constant 0 : i32
    %c0_i32_2 = arith.constant 0 : i32
    return %c0_i32, %c0_i32_0, %c0_i32_1 : i32, i32, i32
  }
  func.func @transform_3(%arg0: i32) -> (i32, i32) {
    %c0_i32 = arith.constant 0 : i32
    %c0_i32_0 = arith.constant 0 : i32
    %c0_i32_1 = arith.constant 0 : i32
    return %c0_i32, %c0_i32_0 : i32, i32
  }
  func.func @transform_4(%arg0: i32) -> (i32, i32, i32) {
    %c0_i32 = arith.constant 0 : i32
    %c0_i32_0 = arith.constant 0 : i32
    %c0_i32_1 = arith.constant 0 : i32
    return %arg0, %c0_i32, %c0_i32_0 : i32, i32, i32
  }
}

</mosaic_0001>

<llo_original>
// kernel: tpu_custom_call.1
$region0: #{tpu_custom_call.1}
  #allocation0 [shape = 'u32[]', space=smem, size = 0x4, offset = 0x4, fixed_abs, tag = 'smem constant byte address 0x4 - core index']
  #allocation1 [shape = 'u32[144,128]{1,0:T(1,128)}', space=vmem, size = 0x12000, scoped, tag = 'internal scratch']
  %s0 = inlined_call_operand.vmem [shape: f32[2,4,256], index: 0, kind: input, shape index: {}]
  %s1 = inlined_call_operand.vmem [shape: f32[9], index: 1, kind: input, shape index: {}]
  %s2 = inlined_call_operand.vmem [shape: f32[9,4,4], index: 2, kind: input, shape index: {}]
  %s3 = inlined_call_operand.vmem [shape: f32[4,1], index: 3, kind: input, shape index: {}]
  %s4 = inlined_call_operand.hbm [shape: f32[2,4,256], index: 4, kind: output, shape index: {}]
  %s5 = sld [smem:[#allocation0]]
  $region53: #{tpu_custom_call.1} parent=0
    _
  %s7 = ssub.s32 1, %s5
  %s8 = scalar_select 0, %s7, %s5
  $region1: #{tpu_custom_call.1} parent=0
    #allocation2 [shape = 'u8[512]{0}', space=smem, size = 0x200, scoped, tag = 'input window, operand 1, single buffered']
    #allocation3 [shape = 's32[2]{0}', space=sflag, size = 0x8, scoped, tag = 'scoped memory for tpu_custom_call.1']
    #allocation4 [shape = 's32[2]{0}', space=sflag, size = 0x8, scoped, tag = 'scoped memory for tpu_custom_call.1']
    #allocation5 [shape = 'u8[8192]{0}', space=vmem, size = 0x2000, scoped, tag = 'output window, operand 0']
    %9 = vsyncpa [#allocation4], 0
    %10 = vsyncpa [#allocation3], 0
    %s11 = scalar_lea.sflag [#allocation3], 1
    %12 = vsyncpa %s11, 0
    loop: start=0, step=1, limit=4
    $region2: #{tpu_custom_call.1} parent=1 // loop_pre_header
      _
    $region3: #{tpu_custom_call.1} parent=1 // loop_header
      %s14 = sphi 0, %s18
      %p15 = scmp.ge.s32.totalorder %s14, 4
      %s24 = sphi 0, %s26
      %s27 = sphi 0, %s24
      %s28 = sphi 0, %s27
      %s44 = sphi 0, %s28
      %s48 = sphi 0, %s48
      %s50 = sphi 0, %s48
      %s51 = sphi 0, %s50
      %s65 = sphi 0, %s51
      %s69 = sphi 0, %s69
      %s71 = sphi 0, %s69
      %s72 = sphi 0, %s71
      %s86 = sphi 0, %s72
      %s90 = sphi 0, %s90
      %s92 = sphi 0, %s90
      %s93 = sphi 0, %s92
      %s107 = sphi 0, %s93
      %s113 = sphi 0, %s115
      %s116 = sphi 0, %s113
      %s117 = sphi 0, %s116
      %s133 = sphi 0, %s117
    $region4: #{tpu_custom_call.1} parent=1 // loop_header_branch
      %17 = sbr.rel (%p15) target = $region8
    $region5: #{tpu_custom_call.1} parent=1 // loop_body
      %s19 = ssub.s32 %s14, 1
      %s20 = ssub.s32 %s14, 2
      %s21 = sadd.s32 %s14, 1
      %s22 = ssub.s32 %s14, %s21
      %p23 = scmp.eq.s32.totalorder %s22, 0
      %s25 = sadd.s32 %s24, 1
      %s26 = scalar_select %p23, %s24, %s25
      %p29 = pneg %p23
      %p30 = scmp.eq.s32.totalorder %s14, 1
      %p31 = por %p29, %p30
      %p32 = scmp.ne.s32.totalorder %s24, %s27
      %p33 = scmp.eq.s32.totalorder %s14, 0
      %p34 = por %p32, %p33
      %p35 = scmp.ne.s32.totalorder %s24, %s27
      %p36 = scmp.eq.s32.totalorder %s19, 1
      %p37 = por %p35, %p36
      %p38 = scmp.ne.s32.totalorder %s27, %s28
      %p39 = scmp.eq.s32.totalorder %s19, 0
      %p40 = por %p38, %p39
      %p41 = scmp.ne.s32.totalorder %s27, %s28
      %p42 = scmp.eq.s32.totalorder %s20, 1
      %p43 = por %p41, %p42
      %p45 = scmp.ne.s32.totalorder %s28, %s44
      %p46 = scmp.eq.s32.totalorder %s20, 0
      %p47 = por %p45, %p46
      %s49 = sadd.s32 %s48, 1
      %p52 = scmp.eq.s32.totalorder %s14, 1
      %p53 = scmp.ne.s32.totalorder %s48, %s50
      %p54 = scmp.eq.s32.totalorder %s14, 0
      %p55 = por %p53, %p54
      %p56 = scmp.ne.s32.totalorder %s48, %s50
      %p57 = scmp.eq.s32.totalorder %s19, 1
      %p58 = por %p56, %p57
      %p59 = scmp.ne.s32.totalorder %s50, %s51
      %p60 = scmp.eq.s32.totalorder %s19, 0
      %p61 = por %p59, %p60
      %p62 = scmp.ne.s32.totalorder %s50, %s51
      %p63 = scmp.eq.s32.totalorder %s20, 1
      %p64 = por %p62, %p63
      %p66 = scmp.ne.s32.totalorder %s51, %s65
      %p67 = scmp.eq.s32.totalorder %s20, 0
      %p68 = por %p66, %p67
      %s70 = sadd.s32 %s69, 1
      %p73 = scmp.eq.s32.totalorder %s14, 1
      %p74 = scmp.ne.s32.totalorder %s69, %s71
      %p75 = scmp.eq.s32.totalorder %s14, 0
      %p76 = por %p74, %p75
      %p77 = scmp.ne.s32.totalorder %s69, %s71
      %p78 = scmp.eq.s32.totalorder %s19, 1
      %p79 = por %p77, %p78
      %p80 = scmp.ne.s32.totalorder %s71, %s72
      %p81 = scmp.eq.s32.totalorder %s19, 0
      %p82 = por %p80, %p81
      %p83 = scmp.ne.s32.totalorder %s71, %s72
      %p84 = scmp.eq.s32.totalorder %s20, 1
      %p85 = por %p83, %p84
      %p87 = scmp.ne.s32.totalorder %s72, %s86
      %p88 = scmp.eq.s32.totalorder %s20, 0
      %p89 = por %p87, %p88
      %s91 = sadd.s32 %s90, 1
      %p94 = scmp.eq.s32.totalorder %s14, 1
      %p95 = scmp.ne.s32.totalorder %s90, %s92
      %p96 = scmp.eq.s32.totalorder %s14, 0
      %p97 = por %p95, %p96
      %p98 = scmp.ne.s32.totalorder %s90, %s92
      %p99 = scmp.eq.s32.totalorder %s19, 1
      %p100 = por %p98, %p99
      %p101 = scmp.ne.s32.totalorder %s92, %s93
      %p102 = scmp.eq.s32.totalorder %s19, 0
      %p103 = por %p101, %p102
      %p104 = scmp.ne.s32.totalorder %s92, %s93
      %p105 = scmp.eq.s32.totalorder %s20, 1
      %p106 = por %p104, %p105
      %p108 = scmp.ne.s32.totalorder %s93, %s107
      %p109 = scmp.eq.s32.totalorder %s20, 0
      %p110 = por %p108, %p109
      %s111 = ssub.s32 %s14, %s21
      %p112 = scmp.eq.s32.totalorder %s111, 0
      %s114 = sadd.s32 %s113, 1
      %s115 = scalar_select %p112, %s113, %s114
      %p118 = pneg %p112
      %p119 = scmp.eq.s32.totalorder %s14, 1
      %p120 = por %p118, %p119
      %p121 = scmp.ne.s32.totalorder %s113, %s116
      %p122 = scmp.eq.s32.totalorder %s14, 0
      %p123 = por %p121, %p122
      %p124 = scmp.ne.s32.totalorder %s113, %s116
      %p125 = scmp.eq.s32.totalorder %s19, 1
      %p126 = por %p124, %p125
      %p127 = scmp.ne.s32.totalorder %s116, %s117
      %p128 = scmp.eq.s32.totalorder %s19, 0
      %p129 = por %p127, %p128
      %p130 = scmp.ne.s32.totalorder %s116, %s117
      %p131 = scmp.eq.s32.totalorder %s20, 1
      %p132 = por %p130, %p131
      %p134 = scmp.ne.s32.totalorder %s117, %s133
      %p135 = scmp.eq.s32.totalorder %s20, 0
      %p136 = por %p134, %p135
      %p137 = scmp.le.s32.totalorder 1, %s14
      %p138 = scmp.lt.s32.totalorder %s14, 3
      %p139 = pnand %p137, %p138
      %p140 = pneg %p139
      // Predicated region
      $region9: #{tpu_custom_call.1} parent=5 // pred_check
        _
      $region10: #{tpu_custom_call.1} parent=5 // pred_check_branch
        %142 = sbr.rel (%p139) target = $region12
      $region11: #{tpu_custom_call.1} parent=5 // pred_region
        %s143 = ssub.s32 %s14, 1
        // Predicated region
        $region13: #{tpu_custom_call.1} parent=11 // pred_check
          %p144 = pneg %p61
        $region14: #{tpu_custom_call.1} parent=11 // pred_check_branch
          %146 = sbr.rel (%p144) target = $region16
        $region15: #{tpu_custom_call.1} parent=11 // pred_region
          %s148 = ssub.s32 16, 16
          %149 = vsyncadd [#allocation4], %s148
          %s151 = sshll.u32 %s1, 4
          %s152 = int_to_ptr.vmem [resolvable:$true] %s151
          %154 = dma.vmem_to_smem %s152, 16, [#allocation2], [#allocation4]
        $region16: #{tpu_custom_call.1} parent=11 // pred_fallthru
          _
        // Predicated region
        $region17: #{tpu_custom_call.1} parent=11 // pred_check
          %p155 = pneg %p82
        $region18: #{tpu_custom_call.1} parent=11 // pred_check_branch
          %157 = sbr.rel (%p155) target = $region20
        $region19: #{tpu_custom_call.1} parent=11 // pred_region
          _
        $region20: #{tpu_custom_call.1} parent=11 // pred_fallthru
          _
        // Predicated region
        $region21: #{tpu_custom_call.1} parent=11 // pred_check
          %p158 = pneg %p103
        $region22: #{tpu_custom_call.1} parent=11 // pred_check_branch
          %160 = sbr.rel (%p158) target = $region24
        $region23: #{tpu_custom_call.1} parent=11 // pred_region
          _
        $region24: #{tpu_custom_call.1} parent=11 // pred_fallthru
          _
      $region12: #{tpu_custom_call.1} parent=5 // pred_fallthru
        _
      %p161 = scmp.lt.s32.totalorder %s14, 2
      // Predicated region
      $region25: #{tpu_custom_call.1} parent=5 // pred_check
        %p162 = pneg %p161
      $region26: #{tpu_custom_call.1} parent=5 // pred_check_branch
        %164 = sbr.rel (%p162) target = $region28
      $region27: #{tpu_custom_call.1} parent=5 // pred_region
        // Predicated region
        $region29: #{tpu_custom_call.1} parent=27 // pred_check
          %p165 = pneg %p34
        $region30: #{tpu_custom_call.1} parent=27 // pred_check_branch
          %167 = sbr.rel (%p165) target = $region32
        $region31: #{tpu_custom_call.1} parent=27 // pred_region
          %p168 = scmp.lt.s32.totalorder %s14, 1
          %s169 = scalar_select %p168, %s14, 1
          %s170 = smul.addr %s169, 2
          %s171 = smul.addr %s170, 4
          %s172 = scalar_lea.vmem %s0, %s171
        $region32: #{tpu_custom_call.1} parent=27 // pred_fallthru
          _
      $region28: #{tpu_custom_call.1} parent=5 // pred_fallthru
        _
      %p173 = scmp.le.s32.totalorder 1, %s14
      %p174 = scmp.lt.s32.totalorder %s14, 3
      %p175 = pnand %p173, %p174
      %p176 = pneg %p175
      // Predicated region
      $region33: #{tpu_custom_call.1} parent=5 // pred_check
        _
      $region34: #{tpu_custom_call.1} parent=5 // pred_check_branch
        %178 = sbr.rel (%p175) target = $region36
      $region35: #{tpu_custom_call.1} parent=5 // pred_region
        %s179 = ssub.s32 %s14, 1
        // Predicated region
        $region37: #{tpu_custom_call.1} parent=35 // pred_check
          %p180 = pneg %p61
        $region38: #{tpu_custom_call.1} parent=35 // pred_check_branch
          %182 = sbr.rel (%p180) target = $region40
        $region39: #{tpu_custom_call.1} parent=35 // pred_region
          %183 = dma.done [#allocation4], 16
        $region40: #{tpu_custom_call.1} parent=35 // pred_fallthru
          _
        %184 = sfence
        %p185 = scmp.lt.s32.totalorder %s19, 1
        %s186 = scalar_select %p185, %s19, 1
        %s187 = smul.addr %s186, 2
        %s188 = smul.addr %s187, 4
        %s189 = scalar_lea.vmem %s0, %s188
        %p190 = pneg %p40
        %p191 = pneg %p37
        %p192 = pneg %p61
        %p193 = pneg %p58
        %p194 = pneg %p82
        %p195 = pneg %p79
        %p196 = pneg %p103
        %p197 = pneg %p100
        %p198 = pneg %p129
        %p199 = pneg %p126
        %s200 = sand.u32 %s116, 1
        %s201 = scalar_lea.sflag [#allocation3], %s200
        %s202 = sand.u32 %s116, 1
        %s203 = smul.addr %s202, 8
        %s204 = scalar_lea.vmem [#allocation5], %s203
        %p205 = scmp.lt.s32.totalorder %s19, 1
        %s206 = scalar_select %p205, %s19, 1
        %s207 = smul.addr %s206, 2
        %s208 = smul.addr %s207, 4
        %s209 = scalar_lea.vmem %s0, %s208
        %v210 = vld [vmem:[%s209] sm:$0xff]
        %v211 = vlaneseq
        %v212 = vand.u32 %v211, 127
        %v213 = vadd.s32 %v212, 128
        %vm214 = vcmp.lt.s32.totalorder %v212, 0
        %v215 = vsub.s32 0, %v212
        %v216 = vsel %vm214, %v215, %v212
        %v217 = vshrl.u32 %v216, 4
        %v218 = vand.u32 %v216, 15
        %v219 = vsub.s32 0, %v218
        %v220 = vsel %vm214, %v219, %v218
        %vm221 = vcmp.lt.s32.totalorder %v213, 0
        %v222 = vsub.s32 0, %v213
        %v223 = vsel %vm221, %v222, %v213
        %v224 = vshrl.u32 %v223, 4
        %v225 = vand.u32 %v223, 15
        %v226 = vsub.s32 0, %v225
        %v227 = vsel %vm221, %v226, %v225
        %vm228 = vcmp.ne.s32.totalorder %v220, 0
        %vm229 = vcmp.ne.s32.totalorder %v227, 0
        %vm230 = vcmp.lt.s32.totalorder %v220, 0
        %vm231 = vcmp.lt.s32.totalorder %v227, 0
        %vm232 = vmand %vm230, %vm228
        %vm233 = vmand %vm231, %vm229
        %v234 = vadd.s32 %v220, 16
        %v235 = vadd.s32 %v227, 16
        %v236 = vsel %vm232, %v234, %v220
        %v237 = vsel %vm233, %v235, %v227
        %vm238 = vcmp.ge.s32.totalorder %v212, 16
        %vm239 = vcmp.ge.s32.totalorder %v213, 16
        %v240 = vsel %vm238, 1, 0
        %v241 = vsel %vm239, 1, 0
        %v242 = vcvt.s32.f32 %v240
        %v243 = vcvt.s32.f32 %v241
        %vm244 = vcmp.lt.s32.totalorder %v212, 240
        %vm245 = vcmp.lt.s32.totalorder %v213, 240
        %v246 = vsel %vm244, 1, 0
        %v247 = vsel %vm245, 1, 0
        %v248 = vcvt.s32.f32 %v246
        %v249 = vcvt.s32.f32 %v247
        %vm250 = vcmp.ne.s32.totalorder %v236, 0
        %vm251 = vcmp.ne.s32.totalorder %v237, 0
        %v252 = vsel %vm250, 1, 0
        %v253 = vsel %vm251, 1, 0
        %v254 = vcvt.s32.f32 %v252
        %v255 = vcvt.s32.f32 %v253
        %vm256 = vcmp.ne.s32.totalorder %v236, 15
        %vm257 = vcmp.ne.s32.totalorder %v237, 15
        %v258 = vsel %vm256, 1, 0
        %v259 = vsel %vm257, 1, 0
        %v260 = vcvt.s32.f32 %v258
        %v261 = vcvt.s32.f32 %v259
        %v262 = vmul.f32 %v242, %v254
        %v263 = vmul.f32 %v243, %v255
        %v264 = vmul.f32 %v242, %v260
        %v265 = vmul.f32 %v243, %v261
        %v266 = vmul.f32 %v248, %v254
        %v267 = vmul.f32 %v249, %v255
        %v268 = vmul.f32 %v248, %v260
        %v269 = vmul.f32 %v249, %v261
        %s270 = sld [smem:[#allocation2 + $0x4]]
        %v271 = vstv %s270
        %v272 = vmul.f32 %v271, %v210
        %v273 = vadd.f32 %v210, %v272
        %s274 = sld [smem:[#allocation2]]
        %v276 = vcombine.high %v210, %v210
        %278 = vrot.lane.b32.xlu0 %v210, 17
        %v279 = vpop.permute.xlu0 %278
        %280 = vrot.lane.b32.xlu0 %v276, 17
        %v281 = vpop.permute.xlu0 %280
        %vm282 = vcmp.lt.s32.totalorder %v212, 17
        %v283 = vsel %vm282, %v279, %v281
        %v284 = vsel %vm282, %v281, %v279
        %v285 = vmul.f32 %v284, %v262
        %v286 = vmul.f32 %v283, %v263
        %v287 = vstv %s274
        %v288 = vmul.f32 %v287, %v285
        %v289 = vmul.f32 %v287, %v286
        %v292 = vcombine.low %v288, %v289
        %v294 = vadd.f32 %v273, %v292
        %s295 = sld [smem:[#allocation2 + $0x1]]
        %296 = vrot.lane.b32.xlu0 %v210, 16
        %v297 = vpop.permute.xlu0 %296
        %298 = vrot.lane.b32.xlu0 %v276, 16
        %v299 = vpop.permute.xlu0 %298
        %vm300 = vcmp.lt.s32.totalorder %v212, 16
        %v301 = vsel %vm300, %v297, %v299
        %v302 = vsel %vm300, %v299, %v297
        %v303 = vmul.f32 %v302, %v242
        %v304 = vmul.f32 %v301, %v243
        %v305 = vstv %s295
        %v306 = vmul.f32 %v305, %v303
        %v307 = vmul.f32 %v305, %v304
        %v310 = vcombine.low %v306, %v307
        %v312 = vadd.f32 %v294, %v310
        %s313 = sld [smem:[#allocation2 + $0x2]]
        %314 = vrot.lane.b32.xlu0 %v210, 15
        %v315 = vpop.permute.xlu0 %314
        %316 = vrot.lane.b32.xlu0 %v276, 15
        %v317 = vpop.permute.xlu0 %316
        %vm318 = vcmp.lt.s32.totalorder %v212, 15
        %v319 = vsel %vm318, %v315, %v317
        %v320 = vsel %vm318, %v317, %v315
        %v321 = vmul.f32 %v320, %v264
        %v322 = vmul.f32 %v319, %v265
        %v323 = vstv %s313
        %v324 = vmul.f32 %v323, %v321
        %v325 = vmul.f32 %v323, %v322
        %v328 = vcombine.low %v324, %v325
        %v330 = vadd.f32 %v312, %v328
        %s331 = sld [smem:[#allocation2 + $0x3]]
        %332 = vrot.lane.b32.xlu0 %v210, 1
        %v333 = vpop.permute.xlu0 %332
        %334 = vrot.lane.b32.xlu0 %v276, 1
        %v335 = vpop.permute.xlu0 %334
        %vm336 = vcmp.lt.s32.totalorder %v212, 1
        %v337 = vsel %vm336, %v333, %v335
        %v338 = vsel %vm336, %v335, %v333
        %v339 = vmul.f32 %v338, %v254
        %v340 = vmul.f32 %v337, %v255
        %v341 = vstv %s331
        %v342 = vmul.f32 %v341, %v339
        %v343 = vmul.f32 %v341, %v340
        %v346 = vcombine.low %v342, %v343
        %v348 = vadd.f32 %v330, %v346
        %s349 = sld [smem:[#allocation2 + $0x5]]
        %350 = vrot.lane.b32.xlu0 %v210, 127
        %v351 = vpop.permute.xlu0 %350
        %352 = vrot.lane.b32.xlu0 %v276, 127
        %v353 = vpop.permute.xlu0 %352
        %vm354 = vcmp.lt.s32.totalorder %v212, 127
        %v355 = vsel %vm354, %v351, %v353
        %v356 = vsel %vm354, %v353, %v351
        %v357 = vmul.f32 %v355, %v260
        %v358 = vmul.f32 %v356, %v261
        %v359 = vstv %s349
        %v360 = vmul.f32 %v359, %v357
        %v361 = vmul.f32 %v359, %v358
        %v364 = vcombine.low %v360, %v361
        %v366 = vadd.f32 %v348, %v364
        %s367 = sld [smem:[#allocation2 + $0x6]]
        %368 = vrot.lane.b32.xlu0 %v210, 113
        %v369 = vpop.permute.xlu0 %368
        %370 = vrot.lane.b32.xlu0 %v276, 113
        %v371 = vpop.permute.xlu0 %370
        %vm372 = vcmp.lt.s32.totalorder %v212, 113
        %v373 = vsel %vm372, %v369, %v371
        %v374 = vsel %vm372, %v371, %v369
        %v375 = vmul.f32 %v373, %v266
        %v376 = vmul.f32 %v374, %v267
        %v377 = vstv %s367
        %v378 = vmul.f32 %v377, %v375
        %v379 = vmul.f32 %v377, %v376
        %v382 = vcombine.low %v378, %v379
        %v384 = vadd.f32 %v366, %v382
        %s385 = sld [smem:[#allocation2 + $0x7]]
        %386 = vrot.lane.b32.xlu0 %v210, 112
        %v387 = vpop.permute.xlu0 %386
        %388 = vrot.lane.b32.xlu0 %v276, 112
        %v389 = vpop.permute.xlu0 %388
        %vm390 = vcmp.lt.s32.totalorder %v212, 112
        %v391 = vsel %vm390, %v387, %v389
        %v392 = vsel %vm390, %v389, %v387
        %v393 = vmul.f32 %v391, %v248
        %v394 = vmul.f32 %v392, %v249
        %v395 = vstv %s385
        %v396 = vmul.f32 %v395, %v393
        %v397 = vmul.f32 %v395, %v394
        %v400 = vcombine.low %v396, %v397
        %v402 = vadd.f32 %v384, %v400
        %s403 = sld [smem:[#allocation2 + $0x8]]
        %404 = vrot.lane.b32.xlu0 %v210, 111
        %v405 = vpop.permute.xlu0 %404
        %406 = vrot.lane.b32.xlu0 %v276, 111
        %v407 = vpop.permute.xlu0 %406
        %vm408 = vcmp.lt.s32.totalorder %v212, 111
        %v409 = vsel %vm408, %v405, %v407
        %v410 = vsel %vm408, %v407, %v405
        %v411 = vmul.f32 %v409, %v268
        %v412 = vmul.f32 %v410, %v269
        %v413 = vstv %s403
        %v414 = vmul.f32 %v413, %v411
        %v415 = vmul.f32 %v413, %v412
        %v418 = vcombine.low %v414, %v415
        %v420 = vadd.f32 %v402, %v418
        %v421 = vld [vmem:[%s3] sm:$0xf]
        %423 = vset.pattern.permute.xlu0 0
        %424 = vperm.xlu0 %423, %v421
        %v425 = vpop.permute.xlu0 %424
        %v427 = vunpack.c.l.s4 839922192
        %v428 = vunpack.c.0.s8 %v427
        %v429 = vlaneseq
        %v430 = vshrl.u32 %v429, 7
        %v431 = vsub.s32 %v428, %v430
        %v432 = vrot.slane %v425, %v431
        %v434 = vadd.f32 %v210, %v432
        %v436 = vcombine.high %v420, %v420
        %438 = vrot.lane.b32.xlu0 %v420, 17
        %v439 = vpop.permute.xlu0 %438
        %440 = vrot.lane.b32.xlu0 %v436, 17
        %v441 = vpop.permute.xlu0 %440
        %v442 = vsel %vm282, %v439, %v441
        %v443 = vsel %vm282, %v441, %v439
        %v444 = vmul.f32 %v443, %v262
        %v445 = vmul.f32 %v442, %v263
        %v446 = vld [vmem:[%s2] sm:$0xf]
        %vm447 = vcmask 31744
        %v449 = vsel %vm447, %v446, 0
        %vm451 = vcmask 1043456
        %v453 = vsel %vm451, %v444, 0
        %v456 = vsel %vm451, %v445, 0
        %458 = vmatprep.subr.mxu0 %v456
        %459 = vmatpush1.msra.mxu0 %v453
        %460 = vmatprep.subr.mxu0 0.0
        %461 = vmatpush1.msra.mxu0 0.0
        %462 = vmatprep.subr.mxu0 0.0
        %463 = vmatpush1.msra.mxu0 0.0
        %464 = vmatprep.subr.mxu0 0.0
        %465 = vmatpush1.msra.mxu0 0.0
        %466 = vmatprep.subr.mxu0 0.0
        %467 = vmatpush1.msra.mxu0 0.0
        %468 = vmatprep.subr.mxu0 0.0
        %469 = vmatpush1.msra.mxu0 0.0
        %470 = vmatprep.subr.mxu0 0.0
        %471 = vmatpush1.msra.mxu0 0.0
        %472 = vmatprep.subr.mxu0 0.0
        %473 = vmatpush1.msra.mxu0 0.0
        %474 = vmatprep.subr.mxu0 0.0
        %475 = vmatpush1.msra.mxu0 0.0
        %476 = vmatprep.subr.mxu0 0.0
        %477 = vmatpush1.msra.mxu0 0.0
        %478 = vmatprep.subr.mxu0 0.0
        %479 = vmatpush1.msra.mxu0 0.0
        %480 = vmatprep.subr.mxu0 0.0
        %481 = vmatpush1.msra.mxu0 0.0
        %482 = vmatprep.subr.mxu0 0.0
        %483 = vmatpush1.msra.mxu0 0.0
        %484 = vmatprep.subr.mxu0 0.0
        %485 = vmatpush1.msra.mxu0 0.0
        %486 = vmatprep.subr.mxu0 0.0
        %487 = vmatpush1.msra.mxu0 0.0
        %488 = vmatprep.subr.mxu0 0.0
        %489 = vmatpush1.msra.mxu0 0.0
        %490 = vmatprep.subr.mxu0 0.0
        %491 = vmatpush1.msra.mxu0 0.0
        %492 = vmatprep.subr.mxu0 0.0
        %493 = vmatpush1.msra.mxu0 0.0
        %494 = vmatprep.subr.mxu0 0.0
        %495 = vmatpush1.msra.mxu0 0.0
        %496 = vmatprep.subr.mxu0 0.0
        %497 = vmatpush1.msra.mxu0 0.0
        %498 = vmatprep.subr.mxu0 0.0
        %499 = vmatpush1.msra.mxu0 0.0
        %500 = vmatprep.subr.mxu0 0.0
        %501 = vmatpush1.msra.mxu0 0.0
        %502 = vmatprep.subr.mxu0 0.0
        %503 = vmatpush1.msra.mxu0 0.0
        %504 = vmatprep.subr.mxu0 0.0
        %505 = vmatpush1.msra.mxu0 0.0
        %506 = vmatprep.subr.mxu0 0.0
        %507 = vmatpush1.msra.mxu0 0.0
        %508 = vmatprep.subr.mxu0 0.0
        %509 = vmatpush1.msra.mxu0 0.0
        %510 = vmatprep.subr.mxu0 0.0
        %511 = vmatpush1.msra.mxu0 0.0
        %512 = vmatprep.subr.mxu0 0.0
        %513 = vmatpush1.msra.mxu0 0.0
        %514 = vmatprep.subr.mxu0 0.0
        %515 = vmatpush1.msra.mxu0 0.0
        %516 = vmatprep.subr.mxu0 0.0
        %517 = vmatpush1.msra.mxu0 0.0
        %518 = vmatprep.subr.mxu0 0.0
        %519 = vmatpush1.msra.mxu0 0.0
        %520 = vmatprep.subr.mxu0 0.0
        %521 = vmatpush1.msra.mxu0 0.0
        %522 = vmatprep.mubr.f32.mxu0 0.0
        %523 = vmatmul.mubr.f32.gmra.mrb[0].mxu0 %v449
        %v524 = vpop.f32.mrb[0].mxu0
        %v525 = vadd.f32 0.0, %v524
        %v526 = vpop.f32.mrb[0].mxu0
        %v527 = vadd.f32 0.0, %v526
        %528 = vdwg.mxu0
        %v531 = vcombine.low %v525, %v527
        %v533 = vadd.f32 %v434, %v531
        %534 = vrot.lane.b32.xlu0 %v420, 16
        %v535 = vpop.permute.xlu0 %534
        %536 = vrot.lane.b32.xlu0 %v436, 16
        %v537 = vpop.permute.xlu0 %536
        %v538 = vsel %vm300, %v535, %v537
        %v539 = vsel %vm300, %v537, %v535
        %v540 = vmul.f32 %v539, %v242
        %v541 = vmul.f32 %v538, %v243
        %s542 = scalar_lea.vmem %s2, 4
        %v543 = vld [vmem:[%s542] sm:$0xf]
        %v545 = vsel %vm447, %v543, 0
        %v548 = vsel %vm451, %v540, 0
        %v551 = vsel %vm451, %v541, 0
        %553 = vmatprep.subr.mxu0 %v551
        %554 = vmatpush1.msra.mxu0 %v548
        %555 = vmatprep.subr.mxu0 0.0
        %556 = vmatpush1.msra.mxu0 0.0
        %557 = vmatprep.subr.mxu0 0.0
        %558 = vmatpush1.msra.mxu0 0.0
        %559 = vmatprep.subr.mxu0 0.0
        %560 = vmatpush1.msra.mxu0 0.0
        %561 = vmatprep.subr.mxu0 0.0
        %562 = vmatpush1.msra.mxu0 0.0
        %563 = vmatprep.subr.mxu0 0.0
        %564 = vmatpush1.msra.mxu0 0.0
        %565 = vmatprep.subr.mxu0 0.0
        %566 = vmatpush1.msra.mxu0 0.0
        %567 = vmatprep.subr.mxu0 0.0
        %568 = vmatpush1.msra.mxu0 0.0
        %569 = vmatprep.subr.mxu0 0.0
        %570 = vmatpush1.msra.mxu0 0.0
        %571 = vmatprep.subr.mxu0 0.0
        %572 = vmatpush1.msra.mxu0 0.0
        %573 = vmatprep.subr.mxu0 0.0
        %574 = vmatpush1.msra.mxu0 0.0
        %575 = vmatprep.subr.mxu0 0.0
        %576 = vmatpush1.msra.mxu0 0.0
        %577 = vmatprep.subr.mxu0 0.0
        %578 = vmatpush1.msra.mxu0 0.0
        %579 = vmatprep.subr.mxu0 0.0
        %580 = vmatpush1.msra.mxu0 0.0
        %581 = vmatprep.subr.mxu0 0.0
        %582 = vmatpush1.msra.mxu0 0.0
        %583 = vmatprep.subr.mxu0 0.0
        %584 = vmatpush1.msra.mxu0 0.0
        %585 = vmatprep.subr.mxu0 0.0
        %586 = vmatpush1.msra.mxu0 0.0
        %587 = vmatprep.subr.mxu0 0.0
        %588 = vmatpush1.msra.mxu0 0.0
        %589 = vmatprep.subr.mxu0 0.0
        %590 = vmatpush1.msra.mxu0 0.0
        %591 = vmatprep.subr.mxu0 0.0
        %592 = vmatpush1.msra.mxu0 0.0
        %593 = vmatprep.subr.mxu0 0.0
        %594 = vmatpush1.msra.mxu0 0.0
        %595 = vmatprep.subr.mxu0 0.0
        %596 = vmatpush1.msra.mxu0 0.0
        %597 = vmatprep.subr.mxu0 0.0
        %598 = vmatpush1.msra.mxu0 0.0
        %599 = vmatprep.subr.mxu0 0.0
        %600 = vmatpush1.msra.mxu0 0.0
        %601 = vmatprep.subr.mxu0 0.0
        %602 = vmatpush1.msra.mxu0 0.0
        %603 = vmatprep.subr.mxu0 0.0
        %604 = vmatpush1.msra.mxu0 0.0
        %605 = vmatprep.subr.mxu0 0.0
        %606 = vmatpush1.msra.mxu0 0.0
        %607 = vmatprep.subr.mxu0 0.0
        %608 = vmatpush1.msra.mxu0 0.0
        %609 = vmatprep.subr.mxu0 0.0
        %610 = vmatpush1.msra.mxu0 0.0
        %611 = vmatprep.subr.mxu0 0.0
        %612 = vmatpush1.msra.mxu0 0.0
        %613 = vmatprep.subr.mxu0 0.0
        %614 = vmatpush1.msra.mxu0 0.0
        %615 = vmatprep.subr.mxu0 0.0
        %616 = vmatpush1.msra.mxu0 0.0
        %617 = vmatprep.mubr.f32.mxu0 0.0
        %618 = vmatmul.mubr.f32.gmra.mrb[0].mxu0 %v545
        %v619 = vpop.f32.mrb[0].mxu0
        %v620 = vadd.f32 0.0, %v619
        %v621 = vpop.f32.mrb[0].mxu0
        %v622 = vadd.f32 0.0, %v621
        %623 = vdwg.mxu0
        %v626 = vcombine.low %v620, %v622
        %v628 = vadd.f32 %v533, %v626
        %629 = vrot.lane.b32.xlu0 %v420, 15
        %v630 = vpop.permute.xlu0 %629
        %631 = vrot.lane.b32.xlu0 %v436, 15
        %v632 = vpop.permute.xlu0 %631
        %v633 = vsel %vm318, %v630, %v632
        %v634 = vsel %vm318, %v632, %v630
        %v635 = vmul.f32 %v634, %v264
        %v636 = vmul.f32 %v633, %v265
        %s637 = scalar_lea.vmem %s2, 8
        %v638 = vld [vmem:[%s637] sm:$0xf]
        %v640 = vsel %vm447, %v638, 0
        %v643 = vsel %vm451, %v635, 0
        %v646 = vsel %vm451, %v636, 0
        %648 = vmatprep.subr.mxu0 %v646
        %649 = vmatpush1.msra.mxu0 %v643
        %650 = vmatprep.subr.mxu0 0.0
        %651 = vmatpush1.msra.mxu0 0.0
        %652 = vmatprep.subr.mxu0 0.0
        %653 = vmatpush1.msra.mxu0 0.0
        %654 = vmatprep.subr.mxu0 0.0
        %655 = vmatpush1.msra.mxu0 0.0
        %656 = vmatprep.subr.mxu0 0.0
        %657 = vmatpush1.msra.mxu0 0.0
        %658 = vmatprep.subr.mxu0 0.0
        %659 = vmatpush1.msra.mxu0 0.0
        %660 = vmatprep.subr.mxu0 0.0
        %661 = vmatpush1.msra.mxu0 0.0
        %662 = vmatprep.subr.mxu0 0.0
        %663 = vmatpush1.msra.mxu0 0.0
        %664 = vmatprep.subr.mxu0 0.0
        %665 = vmatpush1.msra.mxu0 0.0
        %666 = vmatprep.subr.mxu0 0.0
        %667 = vmatpush1.msra.mxu0 0.0
        %668 = vmatprep.subr.mxu0 0.0
        %669 = vmatpush1.msra.mxu0 0.0
        %670 = vmatprep.subr.mxu0 0.0
        %671 = vmatpush1.msra.mxu0 0.0
        %672 = vmatprep.subr.mxu0 0.0
        %673 = vmatpush1.msra.mxu0 0.0
        %674 = vmatprep.subr.mxu0 0.0
        %675 = vmatpush1.msra.mxu0 0.0
        %676 = vmatprep.subr.mxu0 0.0
        %677 = vmatpush1.msra.mxu0 0.0
        %678 = vmatprep.subr.mxu0 0.0
        %679 = vmatpush1.msra.mxu0 0.0
        %680 = vmatprep.subr.mxu0 0.0
        %681 = vmatpush1.msra.mxu0 0.0
        %682 = vmatprep.subr.mxu0 0.0
        %683 = vmatpush1.msra.mxu0 0.0
        %684 = vmatprep.subr.mxu0 0.0
        %685 = vmatpush1.msra.mxu0 0.0
        %686 = vmatprep.subr.mxu0 0.0
        %687 = vmatpush1.msra.mxu0 0.0
        %688 = vmatprep.subr.mxu0 0.0
        %689 = vmatpush1.msra.mxu0 0.0
        %690 = vmatprep.subr.mxu0 0.0
        %691 = vmatpush1.msra.mxu0 0.0
        %692 = vmatprep.subr.mxu0 0.0
        %693 = vmatpush1.msra.mxu0 0.0
        %694 = vmatprep.subr.mxu0 0.0
        %695 = vmatpush1.msra.mxu0 0.0
        %696 = vmatprep.subr.mxu0 0.0
        %697 = vmatpush1.msra.mxu0 0.0
        %698 = vmatprep.subr.mxu0 0.0
        %699 = vmatpush1.msra.mxu0 0.0
        %700 = vmatprep.subr.mxu0 0.0
        %701 = vmatpush1.msra.mxu0 0.0
        %702 = vmatprep.subr.mxu0 0.0
        %703 = vmatpush1.msra.mxu0 0.0
        %704 = vmatprep.subr.mxu0 0.0
        %705 = vmatpush1.msra.mxu0 0.0
        %706 = vmatprep.subr.mxu0 0.0
        %707 = vmatpush1.msra.mxu0 0.0
        %708 = vmatprep.subr.mxu0 0.0
        %709 = vmatpush1.msra.mxu0 0.0
        %710 = vmatprep.subr.mxu0 0.0
        %711 = vmatpush1.msra.mxu0 0.0
        %712 = vmatprep.mubr.f32.mxu0 0.0
        %713 = vmatmul.mubr.f32.gmra.mrb[0].mxu0 %v640
        %v714 = vpop.f32.mrb[0].mxu0
        %v715 = vadd.f32 0.0, %v714
        %v716 = vpop.f32.mrb[0].mxu0
        %v717 = vadd.f32 0.0, %v716
        %718 = vdwg.mxu0
        %v721 = vcombine.low %v715, %v717
        %v723 = vadd.f32 %v628, %v721
        %724 = vrot.lane.b32.xlu0 %v420, 1
        %v725 = vpop.permute.xlu0 %724
        %726 = vrot.lane.b32.xlu0 %v436, 1
        %v727 = vpop.permute.xlu0 %726
        %v728 = vsel %vm336, %v725, %v727
        %v729 = vsel %vm336, %v727, %v725
        %v730 = vmul.f32 %v729, %v254
        %v731 = vmul.f32 %v728, %v255
        %s732 = scalar_lea.vmem %s2, 12
        %v733 = vld [vmem:[%s732] sm:$0xf]
        %v735 = vsel %vm447, %v733, 0
        %v738 = vsel %vm451, %v730, 0
        %v741 = vsel %vm451, %v731, 0
        %743 = vmatprep.subr.mxu0 %v741
        %744 = vmatpush1.msra.mxu0 %v738
        %745 = vmatprep.subr.mxu0 0.0
        %746 = vmatpush1.msra.mxu0 0.0
        %747 = vmatprep.subr.mxu0 0.0
        %748 = vmatpush1.msra.mxu0 0.0
        %749 = vmatprep.subr.mxu0 0.0
        %750 = vmatpush1.msra.mxu0 0.0
        %751 = vmatprep.subr.mxu0 0.0
        %752 = vmatpush1.msra.mxu0 0.0
        %753 = vmatprep.subr.mxu0 0.0
        %754 = vmatpush1.msra.mxu0 0.0
        %755 = vmatprep.subr.mxu0 0.0
        %756 = vmatpush1.msra.mxu0 0.0
        %757 = vmatprep.subr.mxu0 0.0
        %758 = vmatpush1.msra.mxu0 0.0
        %759 = vmatprep.subr.mxu0 0.0
        %760 = vmatpush1.msra.mxu0 0.0
        %761 = vmatprep.subr.mxu0 0.0
        %762 = vmatpush1.msra.mxu0 0.0
        %763 = vmatprep.subr.mxu0 0.0
        %764 = vmatpush1.msra.mxu0 0.0
        %765 = vmatprep.subr.mxu0 0.0
        %766 = vmatpush1.msra.mxu0 0.0
        %767 = vmatprep.subr.mxu0 0.0
        %768 = vmatpush1.msra.mxu0 0.0
        %769 = vmatprep.subr.mxu0 0.0
        %770 = vmatpush1.msra.mxu0 0.0
        %771 = vmatprep.subr.mxu0 0.0
        %772 = vmatpush1.msra.mxu0 0.0
        %773 = vmatprep.subr.mxu0 0.0
        %774 = vmatpush1.msra.mxu0 0.0
        %775 = vmatprep.subr.mxu0 0.0
        %776 = vmatpush1.msra.mxu0 0.0
        %777 = vmatprep.subr.mxu0 0.0
        %778 = vmatpush1.msra.mxu0 0.0
        %779 = vmatprep.subr.mxu0 0.0
        %780 = vmatpush1.msra.mxu0 0.0
        %781 = vmatprep.subr.mxu0 0.0
        %782 = vmatpush1.msra.mxu0 0.0
        %783 = vmatprep.subr.mxu0 0.0
        %784 = vmatpush1.msra.mxu0 0.0
        %785 = vmatprep.subr.mxu0 0.0
        %786 = vmatpush1.msra.mxu0 0.0
        %787 = vmatprep.subr.mxu0 0.0
        %788 = vmatpush1.msra.mxu0 0.0
        %789 = vmatprep.subr.mxu0 0.0
        %790 = vmatpush1.msra.mxu0 0.0
        %791 = vmatprep.subr.mxu0 0.0
        %792 = vmatpush1.msra.mxu0 0.0
        %793 = vmatprep.subr.mxu0 0.0
        %794 = vmatpush1.msra.mxu0 0.0
        %795 = vmatprep.subr.mxu0 0.0
        %796 = vmatpush1.msra.mxu0 0.0
        %797 = vmatprep.subr.mxu0 0.0
        %798 = vmatpush1.msra.mxu0 0.0
        %799 = vmatprep.subr.mxu0 0.0
        %800 = vmatpush1.msra.mxu0 0.0
        %801 = vmatprep.subr.mxu0 0.0
        %802 = vmatpush1.msra.mxu0 0.0
        %803 = vmatprep.subr.mxu0 0.0
        %804 = vmatpush1.msra.mxu0 0.0
        %805 = vmatprep.subr.mxu0 0.0
        %806 = vmatpush1.msra.mxu0 0.0
        %807 = vmatprep.mubr.f32.mxu0 0.0
        %808 = vmatmul.mubr.f32.gmra.mrb[0].mxu0 %v735
        %v809 = vpop.f32.mrb[0].mxu0
        %v810 = vadd.f32 0.0, %v809
        %v811 = vpop.f32.mrb[0].mxu0
        %v812 = vadd.f32 0.0, %v811
        %813 = vdwg.mxu0
        %v816 = vcombine.low %v810, %v812
        %v818 = vadd.f32 %v723, %v816
        %s819 = scalar_lea.vmem %s2, 16
        %v820 = vld [vmem:[%s819] sm:$0xf]
        %v822 = vsel %vm447, %v820, 0
        %v824 = vsel %vm451, %v420, 0
        %v826 = vsel %vm451, %v436, 0
        %828 = vmatprep.subr.mxu0 %v826
        %829 = vmatpush1.msra.mxu0 %v824
        %830 = vmatprep.subr.mxu0 0.0
        %831 = vmatpush1.msra.mxu0 0.0
        %832 = vmatprep.subr.mxu0 0.0
        %833 = vmatpush1.msra.mxu0 0.0
        %834 = vmatprep.subr.mxu0 0.0
        %835 = vmatpush1.msra.mxu0 0.0
        %836 = vmatprep.subr.mxu0 0.0
        %837 = vmatpush1.msra.mxu0 0.0
        %838 = vmatprep.subr.mxu0 0.0
        %839 = vmatpush1.msra.mxu0 0.0
        %840 = vmatprep.subr.mxu0 0.0
        %841 = vmatpush1.msra.mxu0 0.0
        %842 = vmatprep.subr.mxu0 0.0
        %843 = vmatpush1.msra.mxu0 0.0
        %844 = vmatprep.subr.mxu0 0.0
        %845 = vmatpush1.msra.mxu0 0.0
        %846 = vmatprep.subr.mxu0 0.0
        %847 = vmatpush1.msra.mxu0 0.0
        %848 = vmatprep.subr.mxu0 0.0
        %849 = vmatpush1.msra.mxu0 0.0
        %850 = vmatprep.subr.mxu0 0.0
        %851 = vmatpush1.msra.mxu0 0.0
        %852 = vmatprep.subr.mxu0 0.0
        %853 = vmatpush1.msra.mxu0 0.0
        %854 = vmatprep.subr.mxu0 0.0
        %855 = vmatpush1.msra.mxu0 0.0
        %856 = vmatprep.subr.mxu0 0.0
        %857 = vmatpush1.msra.mxu0 0.0
        %858 = vmatprep.subr.mxu0 0.0
        %859 = vmatpush1.msra.mxu0 0.0
        %860 = vmatprep.subr.mxu0 0.0
        %861 = vmatpush1.msra.mxu0 0.0
        %862 = vmatprep.subr.mxu0 0.0
        %863 = vmatpush1.msra.mxu0 0.0
        %864 = vmatprep.subr.mxu0 0.0
        %865 = vmatpush1.msra.mxu0 0.0
        %866 = vmatprep.subr.mxu0 0.0
        %867 = vmatpush1.msra.mxu0 0.0
        %868 = vmatprep.subr.mxu0 0.0
        %869 = vmatpush1.msra.mxu0 0.0
        %870 = vmatprep.subr.mxu0 0.0
        %871 = vmatpush1.msra.mxu0 0.0
        %872 = vmatprep.subr.mxu0 0.0
        %873 = vmatpush1.msra.mxu0 0.0
        %874 = vmatprep.subr.mxu0 0.0
        %875 = vmatpush1.msra.mxu0 0.0
        %876 = vmatprep.subr.mxu0 0.0
        %877 = vmatpush1.msra.mxu0 0.0
        %878 = vmatprep.subr.mxu0 0.0
        %879 = vmatpush1.msra.mxu0 0.0
        %880 = vmatprep.subr.mxu0 0.0
        %881 = vmatpush1.msra.mxu0 0.0
        %882 = vmatprep.subr.mxu0 0.0
        %883 = vmatpush1.msra.mxu0 0.0
        %884 = vmatprep.subr.mxu0 0.0
        %885 = vmatpush1.msra.mxu0 0.0
        %886 = vmatprep.subr.mxu0 0.0
        %887 = vmatpush1.msra.mxu0 0.0
        %888 = vmatprep.subr.mxu0 0.0
        %889 = vmatpush1.msra.mxu0 0.0
        %890 = vmatprep.subr.mxu0 0.0
        %891 = vmatpush1.msra.mxu0 0.0
        %892 = vmatprep.mubr.f32.mxu0 0.0
        %893 = vmatmul.mubr.f32.gmra.mrb[0].mxu0 %v822
        %v894 = vpop.f32.mrb[0].mxu0
        %v895 = vadd.f32 0.0, %v894
        %v896 = vpop.f32.mrb[0].mxu0
        %v897 = vadd.f32 0.0, %v896
        %898 = vdwg.mxu0
        %v901 = vcombine.low %v895, %v897
        %v903 = vadd.f32 %v818, %v901
        %904 = vrot.lane.b32.xlu0 %v420, 127
        %v905 = vpop.permute.xlu0 %904
        %906 = vrot.lane.b32.xlu0 %v436, 127
        %v907 = vpop.permute.xlu0 %906
        %v908 = vsel %vm354, %v905, %v907
        %v909 = vsel %vm354, %v907, %v905
        %v910 = vmul.f32 %v908, %v260
        %v911 = vmul.f32 %v909, %v261
        %s912 = scalar_lea.vmem %s2, 20
        %v913 = vld [vmem:[%s912] sm:$0xf]
        %v915 = vsel %vm447, %v913, 0
        %v918 = vsel %vm451, %v910, 0
        %v921 = vsel %vm451, %v911, 0
        %923 = vmatprep.subr.mxu0 %v921
        %924 = vmatpush1.msra.mxu0 %v918
        %925 = vmatprep.subr.mxu0 0.0
        %926 = vmatpush1.msra.mxu0 0.0
        %927 = vmatprep.subr.mxu0 0.0
        %928 = vmatpush1.msra.mxu0 0.0
        %929 = vmatprep.subr.mxu0 0.0
        %930 = vmatpush1.msra.mxu0 0.0
        %931 = vmatprep.subr.mxu0 0.0
        %932 = vmatpush1.msra.mxu0 0.0
        %933 = vmatprep.subr.mxu0 0.0
        %934 = vmatpush1.msra.mxu0 0.0
        %935 = vmatprep.subr.mxu0 0.0
        %936 = vmatpush1.msra.mxu0 0.0
        %937 = vmatprep.subr.mxu0 0.0
        %938 = vmatpush1.msra.mxu0 0.0
        %939 = vmatprep.subr.mxu0 0.0
        %940 = vmatpush1.msra.mxu0 0.0
        %941 = vmatprep.subr.mxu0 0.0
        %942 = vmatpush1.msra.mxu0 0.0
        %943 = vmatprep.subr.mxu0 0.0
        %944 = vmatpush1.msra.mxu0 0.0
        %945 = vmatprep.subr.mxu0 0.0
        %946 = vmatpush1.msra.mxu0 0.0
        %947 = vmatprep.subr.mxu0 0.0
        %948 = vmatpush1.msra.mxu0 0.0
        %949 = vmatprep.subr.mxu0 0.0
        %950 = vmatpush1.msra.mxu0 0.0
        %951 = vmatprep.subr.mxu0 0.0
        %952 = vmatpush1.msra.mxu0 0.0
        %953 = vmatprep.subr.mxu0 0.0
        %954 = vmatpush1.msra.mxu0 0.0
        %955 = vmatprep.subr.mxu0 0.0
        %956 = vmatpush1.msra.mxu0 0.0
        %957 = vmatprep.subr.mxu0 0.0
        %958 = vmatpush1.msra.mxu0 0.0
        %959 = vmatprep.subr.mxu0 0.0
        %960 = vmatpush1.msra.mxu0 0.0
        %961 = vmatprep.subr.mxu0 0.0
        %962 = vmatpush1.msra.mxu0 0.0
        %963 = vmatprep.subr.mxu0 0.0
        %964 = vmatpush1.msra.mxu0 0.0
        %965 = vmatprep.subr.mxu0 0.0
        %966 = vmatpush1.msra.mxu0 0.0
        %967 = vmatprep.subr.mxu0 0.0
        %968 = vmatpush1.msra.mxu0 0.0
        %969 = vmatprep.subr.mxu0 0.0
        %970 = vmatpush1.msra.mxu0 0.0
        %971 = vmatprep.subr.mxu0 0.0
        %972 = vmatpush1.msra.mxu0 0.0
        %973 = vmatprep.subr.mxu0 0.0
        %974 = vmatpush1.msra.mxu0 0.0
        %975 = vmatprep.subr.mxu0 0.0
        %976 = vmatpush1.msra.mxu0 0.0
        %977 = vmatprep.subr.mxu0 0.0
        %978 = vmatpush1.msra.mxu0 0.0
        %979 = vmatprep.subr.mxu0 0.0
        %980 = vmatpush1.msra.mxu0 0.0
        %981 = vmatprep.subr.mxu0 0.0
        %982 = vmatpush1.msra.mxu0 0.0
        %983 = vmatprep.subr.mxu0 0.0
        %984 = vmatpush1.msra.mxu0 0.0
        %985 = vmatprep.subr.mxu0 0.0
        %986 = vmatpush1.msra.mxu0 0.0
        %987 = vmatprep.mubr.f32.mxu0 0.0
        %988 = vmatmul.mubr.f32.gmra.mrb[0].mxu0 %v915
        %v989 = vpop.f32.mrb[0].mxu0
        %v990 = vadd.f32 0.0, %v989
        %v991 = vpop.f32.mrb[0].mxu0
        %v992 = vadd.f32 0.0, %v991
        %993 = vdwg.mxu0
        %v996 = vcombine.low %v990, %v992
        %v998 = vadd.f32 %v903, %v996
        %999 = vrot.lane.b32.xlu0 %v420, 113
        %v1000 = vpop.permute.xlu0 %999
        %1001 = vrot.lane.b32.xlu0 %v436, 113
        %v1002 = vpop.permute.xlu0 %1001
        %v1003 = vsel %vm372, %v1000, %v1002
        %v1004 = vsel %vm372, %v1002, %v1000
        %v1005 = vmul.f32 %v1003, %v266
        %v1006 = vmul.f32 %v1004, %v267
        %s1007 = scalar_lea.vmem %s2, 24
        %v1008 = vld [vmem:[%s1007] sm:$0xf]
        %v1010 = vsel %vm447, %v1008, 0
        %v1013 = vsel %vm451, %v1005, 0
        %v1016 = vsel %vm451, %v1006, 0
        %1018 = vmatprep.subr.mxu0 %v1016
        %1019 = vmatpush1.msra.mxu0 %v1013
        %1020 = vmatprep.subr.mxu0 0.0
        %1021 = vmatpush1.msra.mxu0 0.0
        %1022 = vmatprep.subr.mxu0 0.0
        %1023 = vmatpush1.msra.mxu0 0.0
        %1024 = vmatprep.subr.mxu0 0.0
        %1025 = vmatpush1.msra.mxu0 0.0
        %1026 = vmatprep.subr.mxu0 0.0
        %1027 = vmatpush1.msra.mxu0 0.0
        %1028 = vmatprep.subr.mxu0 0.0
        %1029 = vmatpush1.msra.mxu0 0.0
        %1030 = vmatprep.subr.mxu0 0.0
        %1031 = vmatpush1.msra.mxu0 0.0
        %1032 = vmatprep.subr.mxu0 0.0
        %1033 = vmatpush1.msra.mxu0 0.0
        %1034 = vmatprep.subr.mxu0 0.0
        %1035 = vmatpush1.msra.mxu0 0.0
        %1036 = vmatprep.subr.mxu0 0.0
        %1037 = vmatpush1.msra.mxu0 0.0
        %1038 = vmatprep.subr.mxu0 0.0
        %1039 = vmatpush1.msra.mxu0 0.0
        %1040 = vmatprep.subr.mxu0 0.0
        %1041 = vmatpush1.msra.mxu0 0.0
        %1042 = vmatprep.subr.mxu0 0.0
        %1043 = vmatpush1.msra.mxu0 0.0
        %1044 = vmatprep.subr.mxu0 0.0
        %1045 = vmatpush1.msra.mxu0 0.0
        %1046 = vmatprep.subr.mxu0 0.0
        %1047 = vmatpush1.msra.mxu0 0.0
        %1048 = vmatprep.subr.mxu0 0.0
        %1049 = vmatpush1.msra.mxu0 0.0
        %1050 = vmatprep.subr.mxu0 0.0
        %1051 = vmatpush1.msra.mxu0 0.0
        %1052 = vmatprep.subr.mxu0 0.0
        %1053 = vmatpush1.msra.mxu0 0.0
        %1054 = vmatprep.subr.mxu0 0.0
        %1055 = vmatpush1.msra.mxu0 0.0
        %1056 = vmatprep.subr.mxu0 0.0
        %1057 = vmatpush1.msra.mxu0 0.0
        %1058 = vmatprep.subr.mxu0 0.0
        %1059 = vmatpush1.msra.mxu0 0.0
        %1060 = vmatprep.subr.mxu0 0.0
        %1061 = vmatpush1.msra.mxu0 0.0
        %1062 = vmatprep.subr.mxu0 0.0
        %1063 = vmatpush1.msra.mxu0 0.0
        %1064 = vmatprep.subr.mxu0 0.0
        %1065 = vmatpush1.msra.mxu0 0.0
        %1066 = vmatprep.subr.mxu0 0.0
        %1067 = vmatpush1.msra.mxu0 0.0
        %1068 = vmatprep.subr.mxu0 0.0
        %1069 = vmatpush1.msra.mxu0 0.0
        %1070 = vmatprep.subr.mxu0 0.0
        %1071 = vmatpush1.msra.mxu0 0.0
        %1072 = vmatprep.subr.mxu0 0.0
        %1073 = vmatpush1.msra.mxu0 0.0
        %1074 = vmatprep.subr.mxu0 0.0
        %1075 = vmatpush1.msra.mxu0 0.0
        %1076 = vmatprep.subr.mxu0 0.0
        %1077 = vmatpush1.msra.mxu0 0.0
        %1078 = vmatprep.subr.mxu0 0.0
        %1079 = vmatpush1.msra.mxu0 0.0
        %1080 = vmatprep.subr.mxu0 0.0
        %1081 = vmatpush1.msra.mxu0 0.0
        %1082 = vmatprep.mubr.f32.mxu0 0.0
        %1083 = vmatmul.mubr.f32.gmra.mrb[0].mxu0 %v1010
        %v1084 = vpop.f32.mrb[0].mxu0
        %v1085 = vadd.f32 0.0, %v1084
        %v1086 = vpop.f32.mrb[0].mxu0
        %v1087 = vadd.f32 0.0, %v1086
        %1088 = vdwg.mxu0
        %v1091 = vcombine.low %v1085, %v1087
        %v1093 = vadd.f32 %v998, %v1091
        %1094 = vrot.lane.b32.xlu0 %v420, 112
        %v1095 = vpop.permute.xlu0 %1094
        %1096 = vrot.lane.b32.xlu0 %v436, 112
        %v1097 = vpop.permute.xlu0 %1096
        %v1098 = vsel %vm390, %v1095, %v1097
        %v1099 = vsel %vm390, %v1097, %v1095
        %v1100 = vmul.f32 %v1098, %v248
        %v1101 = vmul.f32 %v1099, %v249
        %s1102 = scalar_lea.vmem %s2, 28
        %v1103 = vld [vmem:[%s1102] sm:$0xf]
        %v1105 = vsel %vm447, %v1103, 0
        %v1108 = vsel %vm451, %v1100, 0
        %v1111 = vsel %vm451, %v1101, 0
        %1113 = vmatprep.subr.mxu0 %v1111
        %1114 = vmatpush1.msra.mxu0 %v1108
        %1115 = vmatprep.subr.mxu0 0.0
        %1116 = vmatpush1.msra.mxu0 0.0
        %1117 = vmatprep.subr.mxu0 0.0
        %1118 = vmatpush1.msra.mxu0 0.0
        %1119 = vmatprep.subr.mxu0 0.0
        %1120 = vmatpush1.msra.mxu0 0.0
        %1121 = vmatprep.subr.mxu0 0.0
        %1122 = vmatpush1.msra.mxu0 0.0
        %1123 = vmatprep.subr.mxu0 0.0
        %1124 = vmatpush1.msra.mxu0 0.0
        %1125 = vmatprep.subr.mxu0 0.0
        %1126 = vmatpush1.msra.mxu0 0.0
        %1127 = vmatprep.subr.mxu0 0.0
        %1128 = vmatpush1.msra.mxu0 0.0
        %1129 = vmatprep.subr.mxu0 0.0
        %1130 = vmatpush1.msra.mxu0 0.0
        %1131 = vmatprep.subr.mxu0 0.0
        %1132 = vmatpush1.msra.mxu0 0.0
        %1133 = vmatprep.subr.mxu0 0.0
        %1134 = vmatpush1.msra.mxu0 0.0
        %1135 = vmatprep.subr.mxu0 0.0
        %1136 = vmatpush1.msra.mxu0 0.0
        %1137 = vmatprep.subr.mxu0 0.0
        %1138 = vmatpush1.msra.mxu0 0.0
        %1139 = vmatprep.subr.mxu0 0.0
        %1140 = vmatpush1.msra.mxu0 0.0
        %1141 = vmatprep.subr.mxu0 0.0
        %1142 = vmatpush1.msra.mxu0 0.0
        %1143 = vmatprep.subr.mxu0 0.0
        %1144 = vmatpush1.msra.mxu0 0.0
        %1145 = vmatprep.subr.mxu0 0.0
        %1146 = vmatpush1.msra.mxu0 0.0
        %1147 = vmatprep.subr.mxu0 0.0
        %1148 = vmatpush1.msra.mxu0 0.0
        %1149 = vmatprep.subr.mxu0 0.0
        %1150 = vmatpush1.msra.mxu0 0.0
        %1151 = vmatprep.subr.mxu0 0.0
        %1152 = vmatpush1.msra.mxu0 0.0
        %1153 = vmatprep.subr.mxu0 0.0
        %1154 = vmatpush1.msra.mxu0 0.0
        %1155 = vmatprep.subr.mxu0 0.0
        %1156 = vmatpush1.msra.mxu0 0.0
        %1157 = vmatprep.subr.mxu0 0.0
        %1158 = vmatpush1.msra.mxu0 0.0
        %1159 = vmatprep.subr.mxu0 0.0
        %1160 = vmatpush1.msra.mxu0 0.0
        %1161 = vmatprep.subr.mxu0 0.0
        %1162 = vmatpush1.msra.mxu0 0.0
        %1163 = vmatprep.subr.mxu0 0.0
        %1164 = vmatpush1.msra.mxu0 0.0
        %1165 = vmatprep.subr.mxu0 0.0
        %1166 = vmatpush1.msra.mxu0 0.0
        %1167 = vmatprep.subr.mxu0 0.0
        %1168 = vmatpush1.msra.mxu0 0.0
        %1169 = vmatprep.subr.mxu0 0.0
        %1170 = vmatpush1.msra.mxu0 0.0
        %1171 = vmatprep.subr.mxu0 0.0
        %1172 = vmatpush1.msra.mxu0 0.0
        %1173 = vmatprep.subr.mxu0 0.0
        %1174 = vmatpush1.msra.mxu0 0.0
        %1175 = vmatprep.subr.mxu0 0.0
        %1176 = vmatpush1.msra.mxu0 0.0
        %1177 = vmatprep.mubr.f32.mxu0 0.0
        %1178 = vmatmul.mubr.f32.gmra.mrb[0].mxu0 %v1105
        %v1179 = vpop.f32.mrb[0].mxu0
        %v1180 = vadd.f32 0.0, %v1179
        %v1181 = vpop.f32.mrb[0].mxu0
        %v1182 = vadd.f32 0.0, %v1181
        %1183 = vdwg.mxu0
        %v1186 = vcombine.low %v1180, %v1182
        %v1188 = vadd.f32 %v1093, %v1186
        %1189 = vrot.lane.b32.xlu0 %v420, 111
        %v1190 = vpop.permute.xlu0 %1189
        %1191 = vrot.lane.b32.xlu0 %v436, 111
        %v1192 = vpop.permute.xlu0 %1191
        %v1193 = vsel %vm408, %v1190, %v1192
        %v1194 = vsel %vm408, %v1192, %v1190
        %v1195 = vmul.f32 %v1193, %v268
        %v1196 = vmul.f32 %v1194, %v269
        %s1197 = scalar_lea.vmem %s2, 32
        %v1198 = vld [vmem:[%s1197] sm:$0xf]
        %v1200 = vsel %vm447, %v1198, 0
        %v1203 = vsel %vm451, %v1195, 0
        %v1206 = vsel %vm451, %v1196, 0
        %1208 = vmatprep.subr.mxu0 %v1206
        %1209 = vmatpush1.msra.mxu0 %v1203
        %1210 = vmatprep.subr.mxu0 0.0
        %1211 = vmatpush1.msra.mxu0 0.0
        %1212 = vmatprep.subr.mxu0 0.0
        %1213 = vmatpush1.msra.mxu0 0.0
        %1214 = vmatprep.subr.mxu0 0.0
        %1215 = vmatpush1.msra.mxu0 0.0
        %1216 = vmatprep.subr.mxu0 0.0
        %1217 = vmatpush1.msra.mxu0 0.0
        %1218 = vmatprep.subr.mxu0 0.0
        %1219 = vmatpush1.msra.mxu0 0.0
        %1220 = vmatprep.subr.mxu0 0.0
        %1221 = vmatpush1.msra.mxu0 0.0
        %1222 = vmatprep.subr.mxu0 0.0
        %1223 = vmatpush1.msra.mxu0 0.0
        %1224 = vmatprep.subr.mxu0 0.0
        %1225 = vmatpush1.msra.mxu0 0.0
        %1226 = vmatprep.subr.mxu0 0.0
        %1227 = vmatpush1.msra.mxu0 0.0
        %1228 = vmatprep.subr.mxu0 0.0
        %1229 = vmatpush1.msra.mxu0 0.0
        %1230 = vmatprep.subr.mxu0 0.0
        %1231 = vmatpush1.msra.mxu0 0.0
        %1232 = vmatprep.subr.mxu0 0.0
        %1233 = vmatpush1.msra.mxu0 0.0
        %1234 = vmatprep.subr.mxu0 0.0
        %1235 = vmatpush1.msra.mxu0 0.0
        %1236 = vmatprep.subr.mxu0 0.0
        %1237 = vmatpush1.msra.mxu0 0.0
        %1238 = vmatprep.subr.mxu0 0.0
        %1239 = vmatpush1.msra.mxu0 0.0
        %1240 = vmatprep.subr.mxu0 0.0
        %1241 = vmatpush1.msra.mxu0 0.0
        %1242 = vmatprep.subr.mxu0 0.0
        %1243 = vmatpush1.msra.mxu0 0.0
        %1244 = vmatprep.subr.mxu0 0.0
        %1245 = vmatpush1.msra.mxu0 0.0
        %1246 = vmatprep.subr.mxu0 0.0
        %1247 = vmatpush1.msra.mxu0 0.0
        %1248 = vmatprep.subr.mxu0 0.0
        %1249 = vmatpush1.msra.mxu0 0.0
        %1250 = vmatprep.subr.mxu0 0.0
        %1251 = vmatpush1.msra.mxu0 0.0
        %1252 = vmatprep.subr.mxu0 0.0
        %1253 = vmatpush1.msra.mxu0 0.0
        %1254 = vmatprep.subr.mxu0 0.0
        %1255 = vmatpush1.msra.mxu0 0.0
        %1256 = vmatprep.subr.mxu0 0.0
        %1257 = vmatpush1.msra.mxu0 0.0
        %1258 = vmatprep.subr.mxu0 0.0
        %1259 = vmatpush1.msra.mxu0 0.0
        %1260 = vmatprep.subr.mxu0 0.0
        %1261 = vmatpush1.msra.mxu0 0.0
        %1262 = vmatprep.subr.mxu0 0.0
        %1263 = vmatpush1.msra.mxu0 0.0
        %1264 = vmatprep.subr.mxu0 0.0
        %1265 = vmatpush1.msra.mxu0 0.0
        %1266 = vmatprep.subr.mxu0 0.0
        %1267 = vmatpush1.msra.mxu0 0.0
        %1268 = vmatprep.subr.mxu0 0.0
        %1269 = vmatpush1.msra.mxu0 0.0
        %1270 = vmatprep.subr.mxu0 0.0
        %1271 = vmatpush1.msra.mxu0 0.0
        %1272 = vmatprep.mubr.f32.mxu0 0.0
        %1273 = vmatmul.mubr.f32.gmra.mrb[0].mxu0 %v1200
        %v1274 = vpop.f32.mrb[0].mxu0
        %v1275 = vadd.f32 0.0, %v1274
        %v1276 = vpop.f32.mrb[0].mxu0
        %v1277 = vadd.f32 0.0, %v1276
        %1278 = vdwg.mxu0
        %v1281 = vcombine.low %v1275, %v1277
        %v1283 = vadd.f32 %v1188, %v1281
        %1284 = vst [vmem:[%s204] sm:$0xff] %v1283
        %s1285 = sand.u32 %s116, 1
        %s1286 = scalar_lea.sflag [#allocation3], %s1285
        %s1287 = sand.u32 %s116, 1
        %s1288 = smul.addr %s1287, 8
        %s1289 = scalar_lea.vmem [#allocation5], %s1288
        // Predicated region
        $region41: #{tpu_custom_call.1} parent=35 // pred_check
          %p1290 = pneg %p126
        $region42: #{tpu_custom_call.1} parent=35 // pred_check_branch
          %1292 = sbr.rel (%p1290) target = $region44
        $region43: #{tpu_custom_call.1} parent=35 // pred_region
          %s1294 = ssub.s32 128, 128
          %1295 = vsyncadd %s1286, %s1294
          %s1296 = smul.addr %s19, 2
          %s1297 = smul.addr %s1296, 64
          %s1298 = scalar_lea.hbm %s4, %s1297
          %s1300 = sshll.u32 %s1289, 4
          %s1301 = int_to_ptr.vmem [resolvable:$true] %s1300
          %1303 = dma.vmem_to_hbm [thread:$0]  %s1301, 128, %s1298, %s1286
        $region44: #{tpu_custom_call.1} parent=35 // pred_fallthru
          _
      $region36: #{tpu_custom_call.1} parent=5 // pred_fallthru
        _
      %p1304 = scmp.le.s32.totalorder 2, %s14
      // Predicated region
      $region45: #{tpu_custom_call.1} parent=5 // pred_check
        %p1305 = pneg %p1304
      $region46: #{tpu_custom_call.1} parent=5 // pred_check_branch
        %1307 = sbr.rel (%p1305) target = $region48
      $region47: #{tpu_custom_call.1} parent=5 // pred_region
        %s1308 = ssub.s32 %s14, 2
        // Predicated region
        $region49: #{tpu_custom_call.1} parent=47 // pred_check
          %p1309 = pneg %p132
        $region50: #{tpu_custom_call.1} parent=47 // pred_check_branch
          %1311 = sbr.rel (%p1309) target = $region52
        $region51: #{tpu_custom_call.1} parent=47 // pred_region
          %s1312 = sand.u32 %s117, 1
          %s1313 = scalar_lea.sflag [#allocation3], %s1312
          %s1314 = sand.u32 %s117, 1
          %s1315 = smul.addr %s1314, 8
          %s1316 = scalar_lea.vmem [#allocation5], %s1315
          %1317 = dma.done %s1313, 128
        $region52: #{tpu_custom_call.1} parent=47 // pred_fallthru
          _
      $region48: #{tpu_custom_call.1} parent=5 // pred_fallthru
        _
    $region6: #{tpu_custom_call.1} parent=1 // loop_footer
      %s18 = sadd.s32 1, %s14
    $region7: #{tpu_custom_call.1} parent=1 // loop_footer_branch
      %13 = sbr.rel target = $region3
    $region8: #{tpu_custom_call.1} parent=1 // loop_exit
      _
    %1318 = vsyncpa [#allocation3], 1
    %s1319 = scalar_lea.sflag [#allocation3], 1
    %1320 = vsyncpa %s1319, 1
    %1321 = vsyncpa [#allocation4], 1
    %s1322 = scalar_lea.sflag [#allocation4], 1
    %1323 = vsyncpa %s1322, 1

</llo_original>
